<compile_context>
chip_gen: v7x
topology: tpu7x:2x2x1
jax: 0.10.0
libtpu: 0.0.40
codegen_flags: <defaults>
</compile_context>

<pallas_src>
import math

import jax
import jax.numpy as jnp
from jax.experimental import pallas as pl
from jax.experimental.pallas import tpu as pltpu

EPS = 1e-5
# bf16 MXU operands for the conv only (f32 accumulation, f32 everywhere else).
# Flip to jnp.float32 for a fully-f32 conv path.
CONV_DTYPE = jnp.bfloat16


def model_kernel(xc_ref, cw_ref, bn1_ref, w1_ref, bn2_ref, w2_ref, out_ref):
    # xc_ref : (N, C*K, L)  im2col input patches              (CONV_DTYPE)
    # cw_ref : (F, C*K)     conv weight flattened over (C,K)  (CONV_DTYPE)
    # bn1_ref: (2, F, 1)    [gamma1; beta1]                   (f32)
    # w1_ref : (U1, F, L)   FC1 weight, w1v[u,f,l]=w1[u,f*L+l] (f32)
    # bn2_ref: (3, 1, U1)   [gamma2; beta2; fc2 bias padded]  (f32)
    # w2_ref : (U1, U2)     FC2 weight, pre-transposed        (f32)
    # out_ref: (N, U2)
    N, U2 = out_ref.shape
    U1, F, L = w1_ref.shape

    # ---- Conv1d as im2col: one (F, C*K) @ (C*K, L) MXU matmul per sample ----
    # Conv bias omitted: exactly cancelled by BN1's batch-mean subtraction.
    cw = cw_ref[...]
    y = [jnp.dot(cw, xc_ref[n], preferred_element_type=jnp.float32)
         for n in range(N)]                                  # N x (F, L) f32

    # ---- BatchNorm1d(F), training mode, single-pass stats, fused ReLU -------
    s1 = jnp.zeros((F, 1), jnp.float32)
    s2 = jnp.zeros((F, 1), jnp.float32)
    for yn in y:
        s1 = s1 + jnp.sum(yn, axis=1, keepdims=True)
        s2 = s2 + jnp.sum(yn * yn, axis=1, keepdims=True)
    inv_cnt = 1.0 / float(N * L)
    m1 = s1 * inv_cnt
    v1 = s2 * inv_cnt - m1 * m1                              # biased variance
    scale1 = jax.lax.rsqrt(v1 + EPS) * bn1_ref[0]            # (F, 1)
    shift1 = bn1_ref[1] - m1 * scale1                        # (F, 1)
    y = [jnp.maximum(yn * scale1 + shift1, 0.0) for yn in y]

    # ---- Flatten + Linear(F*L -> U1): VPU mul + reduce ----------------------
    # h[n, u] = sum_{f,l} y[n][f,l] * w1v[u,f,l].  w1_ref[u] is a leading-index
    # slab load (no sublane slicing, no per-channel MXU dots).  FC1 bias
    # omitted: exactly cancelled by BN2's batch-mean subtraction.
    col_iota = jax.lax.broadcasted_iota(jnp.int32, (1, U1), 1)
    h = [jnp.zeros((1, U1), jnp.float32) for _ in range(N)]
    for u in range(U1):
        wu = w1_ref[u]                                       # (F, L)
        sel = col_iota == u                                  # (1, U1)
        for n in range(N):
            p = y[n] * wu                                    # (F, L)
            s = jnp.sum(jnp.sum(p, axis=1, keepdims=True),
                        axis=0, keepdims=True)               # (1, 1)
            h[n] = h[n] + jnp.where(sel, s, 0.0)

    # ---- BatchNorm1d(U1) over the batch (training mode) + ReLU --------------
    m2 = h[0]
    for n in range(1, N):
        m2 = m2 + h[n]
    m2 = m2 * (1.0 / N)
    d = [hn - m2 for hn in h]
    v2 = d[0] * d[0]
    for n in range(1, N):
        v2 = v2 + d[n] * d[n]
    v2 = v2 * (1.0 / N)
    scale2 = jax.lax.rsqrt(v2 + EPS) * bn2_ref[0]            # (1, U1)
    a = [jnp.maximum(dn * scale2 + bn2_ref[1], 0.0) for dn in d]

    # ---- Linear(U1 -> U2) + bias (row 2 of the packed BN2 operand) ----------
    w2 = w2_ref[...]                                         # (U1, U2)
    fb2 = bn2_ref[2][:, :U2]                                 # (1, U2)
    for n in range(N):
        out_ref[n:n + 1, :] = (
            jnp.dot(a[n], w2, preferred_element_type=jnp.float32) + fb2)


def torch_model_forward(x, params):
    N, C, L = x.shape
    F, _, K = params["cw"].shape
    U1 = params["w1"].shape[0]
    U2 = params["w2"].shape[0]
    assert U2 <= U1  # fc2 bias is zero-padded into the (3, 1, U1) operand
    pad = K // 2

    # ---- glue: im2col + parameter reshapes (plain JAX, outside the kernel) --
    xp = jnp.pad(x, ((0, 0), (0, 0), (pad, pad)))                    # (N, C, L+2p)
    # x_col[n, c*K + k, l] = xp[n, c, l + k]
    x_col = jnp.stack([xp[:, :, k:k + L] for k in range(K)], axis=2)  # (N, C, K, L)
    x_col = x_col.reshape(N, C * K, L).astype(CONV_DTYPE)
    cw2d = params["cw"].reshape(F, C * K).astype(CONV_DTYPE)          # (F, C*K)
    bn1 = jnp.stack([params["g1"], params["bt1"]]).reshape(2, F, 1)
    w1v = params["w1"].reshape(U1, F, L)                              # (U1, F, L)
    fb2p = jnp.zeros((U1,), jnp.float32).at[:U2].set(params["fb2"])
    bn2 = jnp.stack([params["g2"], params["bt2"], fb2p]).reshape(3, 1, U1)
    w2t = params["w2"].T                                              # (U1, U2)

    vmem = pl.BlockSpec(memory_space=pltpu.MemorySpace.VMEM)
    return pl.pallas_call(
        model_kernel,
        out_shape=jax.ShapeDtypeStruct((N, U2), jnp.float32),
        in_specs=[vmem] * 6,
        out_specs=vmem,
    )(x_col, cw2d, bn1, w1v, bn2, w2t)


def reference_forward(x, p, conv_operand_dtype=jnp.float32):
    """Pure-JAX reference with the module's exact (training-mode) semantics.

    `conv_operand_dtype` optionally rounds the conv operands exactly the way
    the kernel feeds them to the MXU (bf16 inputs, f32 accumulation); all other
    math stays f32, so comparing against this reference validates the kernel
    without the deliberate conv quantization being amplified by the
    eps-sensitive batch-2 BatchNorm1d(5)."""
    hi = jax.lax.Precision.HIGHEST
    pad = p["cw"].shape[-1] // 2
    xq = x.astype(conv_operand_dtype).astype(jnp.float32)
    wq = p["cw"].astype(conv_operand_dtype).astype(jnp.float32)
    y = jax.lax.conv_general_dilated(
        xq, wq, window_strides=(1,), padding=[(pad, pad)],
        dimension_numbers=("NCH", "OIH", "NCH"), precision=hi)
    y = y + p["cb"][None, :, None]
    m = y.mean(axis=(0, 2), keepdims=True)
    v = ((y - m) ** 2).mean(axis=(0, 2), keepdims=True)
    y = (y - m) / jnp.sqrt(v + EPS) * p["g1"][None, :, None] + p["bt1"][None, :, None]
    y = jnp.maximum(y, 0.0)
    h = jnp.dot(y.reshape(y.shape[0], -1), p["w1"].T, precision=hi) + p["fb1"]
    m2 = h.mean(axis=0, keepdims=True)
    v2 = ((h - m2) ** 2).mean(axis=0, keepdims=True)
    h = (h - m2) / jnp.sqrt(v2 + EPS) * p["g2"] + p["bt2"]
    h = jnp.maximum(h, 0.0)
    return jnp.dot(h, p["w2"].T, precision=hi) + p["fb2"]


def init_params(key, C, L, F, K, U1, U2):
    ks = jax.random.split(key, 10)
    bc = 1.0 / math.sqrt(C * K)
    b1 = 1.0 / math.sqrt(F * L)
    b2 = 1.0 / math.sqrt(U1)
    u = lambda k, s, b: jax.random.uniform(k, s, jnp.float32, -b, b)
    return {
        "cw": u(ks[0], (F, C, K), bc),
        "cb": u(ks[1], (F,), bc),
        "g1": 1.0 + 0.1 * jax.random.normal(ks[2], (F,), jnp.float32),
        "bt1": 0.1 * jax.random.normal(ks[3], (F,), jnp.float32),
        "w1": u(ks[4], (U1, F * L), b1),
        "fb1": u(ks[5], (U1,), b1),
        "g2": 1.0 + 0.1 * jax.random.normal(ks[6], (U1,), jnp.float32),
        "bt2": 0.1 * jax.random.normal(ks[7], (U1,), jnp.float32),
        "w2": u(ks[8], (U2, U1), b2),
        "fb2": u(ks[9], (U2,), b2),
    }


if __name__ == "__main__":
    N = 2
    C, L = 4, 1000            # fixed by the module (Linear expects 10*1000 inputs)
    F, K = 10, 21
    U1, U2 = 5, 2

    key = jax.random.PRNGKey(0)
    kx, kp = jax.random.split(key)
    x = jax.random.normal(kx, (N, C, L), jnp.float32)
    params = init_params(kp, C, L, F, K, U1, U2)

    out = jax.block_until_ready(torch_model_forward(x, params))
    assert out.shape == (N, U2)

    # Apples-to-apples check: the reference rounds the conv operands to
    # CONV_DTYPE exactly like the kernel (everything else f32).
    ref = jax.block_until_ready(reference_forward(x, params, CONV_DTYPE))
    assert jnp.allclose(out, ref, atol=5e-3, rtol=5e-3), (out, ref)
    print("KERNEL_OK")
</pallas_src>

<mosaic_0001>
module attributes {stable_mosaic.version = 11 : i64} {
  func.func @model_kernel(%arg0: memref<2x84x1000xbf16, #tpu.memory_space<vmem>>, %arg1: memref<10x84xbf16, #tpu.memory_space<vmem>>, %arg2: memref<2x10x1xf32, #tpu.memory_space<vmem>>, %arg3: memref<5x10x1000xf32, #tpu.memory_space<vmem>>, %arg4: memref<3x1x5xf32, #tpu.memory_space<vmem>>, %arg5: memref<5x2xf32, #tpu.memory_space<vmem>>, %arg6: memref<2x2xf32, #tpu.memory_space<vmem>>) attributes {dimension_semantics = [], scalar_prefetch = 0 : i64, scratch_operands = 0 : i64, tpu.core_type = #tpu.core_type<tc>} {
    %c0 = arith.constant 0 : index
    %c0_0 = arith.constant 0 : index
    %0 = vector.load %arg1[%c0, %c0_0] : memref<10x84xbf16, #tpu.memory_space<vmem>>, vector<10x84xbf16>
    %c0_1 = arith.constant 0 : index
    %c0_2 = arith.constant 0 : index
    %c0_3 = arith.constant 0 : index
    %1 = vector.load %arg0[%c0_1, %c0_2, %c0_3] : memref<2x84x1000xbf16, #tpu.memory_space<vmem>>, vector<1x84x1000xbf16>
    %2 = vector.shape_cast %1 : vector<1x84x1000xbf16> to vector<84x1000xbf16>
    %cst = arith.constant dense<0.000000e+00> : vector<10x1000xf32>
    %3 = tpu.matmul %0, %2, %cst {dimension_numbers = #tpu.dot_dimension_numbers<[1], [0], [0], [1], [0, 0, 1, 1], [], []>} : vector<10x84xbf16>, vector<84x1000xbf16>, vector<10x1000xf32> -> vector<10x1000xf32>
    %c1 = arith.constant 1 : index
    %c0_4 = arith.constant 0 : index
    %c0_5 = arith.constant 0 : index
    %4 = vector.load %arg0[%c1, %c0_4, %c0_5] : memref<2x84x1000xbf16, #tpu.memory_space<vmem>>, vector<1x84x1000xbf16>
    %5 = vector.shape_cast %4 : vector<1x84x1000xbf16> to vector<84x1000xbf16>
    %cst_6 = arith.constant dense<0.000000e+00> : vector<10x1000xf32>
    %6 = tpu.matmul %0, %5, %cst_6 {dimension_numbers = #tpu.dot_dimension_numbers<[1], [0], [0], [1], [0, 0, 1, 1], [], []>} : vector<10x84xbf16>, vector<84x1000xbf16>, vector<10x1000xf32> -> vector<10x1000xf32>
    %cst_7 = arith.constant 0.000000e+00 : f32
    %7 = vector.broadcast %cst_7 : f32 to vector<10x1xf32>
    %cst_8 = arith.constant 0.000000e+00 : f32
    %8 = vector.broadcast %cst_8 : f32 to vector<10x1xf32>
    %cst_9 = arith.constant dense<0.000000e+00> : vector<10xf32>
    %9 = vector.multi_reduction <add>, %3, %cst_9 [1] : vector<10x1000xf32> to vector<10xf32>
    %10 = vector.shape_cast %9 : vector<10xf32> to vector<10x1xf32>
    %11 = arith.addf %7, %10 : vector<10x1xf32>
    %12 = arith.mulf %3, %3 : vector<10x1000xf32>
    %cst_10 = arith.constant dense<0.000000e+00> : vector<10xf32>
    %13 = vector.multi_reduction <add>, %12, %cst_10 [1] : vector<10x1000xf32> to vector<10xf32>
    %14 = vector.shape_cast %13 : vector<10xf32> to vector<10x1xf32>
    %15 = arith.addf %8, %14 : vector<10x1xf32>
    %cst_11 = arith.constant dense<0.000000e+00> : vector<10xf32>
    %16 = vector.multi_reduction <add>, %6, %cst_11 [1] : vector<10x1000xf32> to vector<10xf32>
    %17 = vector.shape_cast %16 : vector<10xf32> to vector<10x1xf32>
    %18 = arith.addf %11, %17 : vector<10x1xf32>
    %19 = arith.mulf %6, %6 : vector<10x1000xf32>
    %cst_12 = arith.constant dense<0.000000e+00> : vector<10xf32>
    %20 = vector.multi_reduction <add>, %19, %cst_12 [1] : vector<10x1000xf32> to vector<10xf32>
    %21 = vector.shape_cast %20 : vector<10xf32> to vector<10x1xf32>
    %22 = arith.addf %15, %21 : vector<10x1xf32>
    %cst_13 = arith.constant 5.000000e-04 : f32
    %23 = vector.broadcast %cst_13 : f32 to vector<10x1xf32>
    %24 = arith.mulf %18, %23 : vector<10x1xf32>
    %cst_14 = arith.constant 5.000000e-04 : f32
    %25 = vector.broadcast %cst_14 : f32 to vector<10x1xf32>
    %26 = arith.mulf %22, %25 : vector<10x1xf32>
    %27 = arith.mulf %24, %24 : vector<10x1xf32>
    %28 = arith.subf %26, %27 : vector<10x1xf32>
    %cst_15 = arith.constant 9.99999974E-6 : f32
    %29 = vector.broadcast %cst_15 : f32 to vector<10x1xf32>
    %30 = arith.addf %28, %29 : vector<10x1xf32>
    %31 = math.rsqrt %30 : vector<10x1xf32>
    %c0_16 = arith.constant 0 : index
    %c0_17 = arith.constant 0 : index
    %c0_18 = arith.constant 0 : index
    %32 = vector.load %arg2[%c0_16, %c0_17, %c0_18] : memref<2x10x1xf32, #tpu.memory_space<vmem>>, vector<1x10x1xf32>
    %33 = vector.shape_cast %32 : vector<1x10x1xf32> to vector<10x1xf32>
    %34 = arith.mulf %31, %33 : vector<10x1xf32>
    %c1_19 = arith.constant 1 : index
    %c0_20 = arith.constant 0 : index
    %c0_21 = arith.constant 0 : index
    %35 = vector.load %arg2[%c1_19, %c0_20, %c0_21] : memref<2x10x1xf32, #tpu.memory_space<vmem>>, vector<1x10x1xf32>
    %36 = vector.shape_cast %35 : vector<1x10x1xf32> to vector<10x1xf32>
    %37 = arith.mulf %24, %34 : vector<10x1xf32>
    %38 = arith.subf %36, %37 : vector<10x1xf32>
    %39 = vector.broadcast %34 : vector<10x1xf32> to vector<10x1000xf32>
    %40 = arith.mulf %3, %39 : vector<10x1000xf32>
    %41 = vector.broadcast %38 : vector<10x1xf32> to vector<10x1000xf32>
    %42 = arith.addf %40, %41 : vector<10x1000xf32>
    %cst_22 = arith.constant 0.000000e+00 : f32
    %43 = vector.broadcast %cst_22 : f32 to vector<10x1000xf32>
    %44 = arith.maximumf %42, %43 : vector<10x1000xf32>
    %45 = vector.broadcast %34 : vector<10x1xf32> to vector<10x1000xf32>
    %46 = arith.mulf %6, %45 : vector<10x1000xf32>
    %47 = vector.broadcast %38 : vector<10x1xf32> to vector<10x1000xf32>
    %48 = arith.addf %46, %47 : vector<10x1000xf32>
    %cst_23 = arith.constant 0.000000e+00 : f32
    %49 = vector.broadcast %cst_23 : f32 to vector<10x1000xf32>
    %50 = arith.maximumf %48, %49 : vector<10x1000xf32>
    %51 = tpu.iota {dimensions = array<i32: 1>} : vector<1x5xi32>
    %cst_24 = arith.constant 0.000000e+00 : f32
    %52 = vector.broadcast %cst_24 : f32 to vector<1x5xf32>
    %cst_25 = arith.constant 0.000000e+00 : f32
    %53 = vector.broadcast %cst_25 : f32 to vector<1x5xf32>
    %c0_26 = arith.constant 0 : index
    %c0_27 = arith.constant 0 : index
    %c0_28 = arith.constant 0 : index
    %54 = vector.load %arg3[%c0_26, %c0_27, %c0_28] : memref<5x10x1000xf32, #tpu.memory_space<vmem>>, vector<1x10x1000xf32>
    %55 = vector.shape_cast %54 : vector<1x10x1000xf32> to vector<10x1000xf32>
    %c0_i32 = arith.constant 0 : i32
    %56 = vector.broadcast %c0_i32 : i32 to vector<1x5xi32>
    %57 = arith.cmpi eq, %51, %56 : vector<1x5xi32>
    %58 = arith.mulf %44, %55 : vector<10x1000xf32>
    %cst_29 = arith.constant dense<0.000000e+00> : vector<10xf32>
    %59 = vector.multi_reduction <add>, %58, %cst_29 [1] : vector<10x1000xf32> to vector<10xf32>
    %60 = vector.shape_cast %59 : vector<10xf32> to vector<10x1xf32>
    %cst_30 = arith.constant dense<0.000000e+00> : vector<1xf32>
    %61 = vector.multi_reduction <add>, %60, %cst_30 [0] : vector<10x1xf32> to vector<1xf32>
    %62 = vector.shape_cast %61 : vector<1xf32> to vector<1x1xf32>
    %cst_31 = arith.constant 0.000000e+00 : f32
    %63 = vector.shape_cast %62 : vector<1x1xf32> to vector<1x1xf32>
    %64 = vector.broadcast %63 : vector<1x1xf32> to vector<1x5xf32>
    %65 = vector.broadcast %cst_31 : f32 to vector<1x5xf32>
    %66 = arith.select %57, %64, %65 : vector<1x5xi1>, vector<1x5xf32>
    %67 = arith.addf %52, %66 : vector<1x5xf32>
    %68 = arith.mulf %50, %55 : vector<10x1000xf32>
    %cst_32 = arith.constant dense<0.000000e+00> : vector<10xf32>
    %69 = vector.multi_reduction <add>, %68, %cst_32 [1] : vector<10x1000xf32> to vector<10xf32>
    %70 = vector.shape_cast %69 : vector<10xf32> to vector<10x1xf32>
    %cst_33 = arith.constant dense<0.000000e+00> : vector<1xf32>
    %71 = vector.multi_reduction <add>, %70, %cst_33 [0] : vector<10x1xf32> to vector<1xf32>
    %72 = vector.shape_cast %71 : vector<1xf32> to vector<1x1xf32>
    %cst_34 = arith.constant 0.000000e+00 : f32
    %73 = vector.shape_cast %72 : vector<1x1xf32> to vector<1x1xf32>
    %74 = vector.broadcast %73 : vector<1x1xf32> to vector<1x5xf32>
    %75 = vector.broadcast %cst_34 : f32 to vector<1x5xf32>
    %76 = arith.select %57, %74, %75 : vector<1x5xi1>, vector<1x5xf32>
    %77 = arith.addf %53, %76 : vector<1x5xf32>
    %c1_35 = arith.constant 1 : index
    %c0_36 = arith.constant 0 : index
    %c0_37 = arith.constant 0 : index
    %78 = vector.load %arg3[%c1_35, %c0_36, %c0_37] : memref<5x10x1000xf32, #tpu.memory_space<vmem>>, vector<1x10x1000xf32>
    %79 = vector.shape_cast %78 : vector<1x10x1000xf32> to vector<10x1000xf32>
    %c1_i32 = arith.constant 1 : i32
    %80 = vector.broadcast %c1_i32 : i32 to vector<1x5xi32>
    %81 = arith.cmpi eq, %51, %80 : vector<1x5xi32>
    %82 = arith.mulf %44, %79 : vector<10x1000xf32>
    %cst_38 = arith.constant dense<0.000000e+00> : vector<10xf32>
    %83 = vector.multi_reduction <add>, %82, %cst_38 [1] : vector<10x1000xf32> to vector<10xf32>
    %84 = vector.shape_cast %83 : vector<10xf32> to vector<10x1xf32>
    %cst_39 = arith.constant dense<0.000000e+00> : vector<1xf32>
    %85 = vector.multi_reduction <add>, %84, %cst_39 [0] : vector<10x1xf32> to vector<1xf32>
    %86 = vector.shape_cast %85 : vector<1xf32> to vector<1x1xf32>
    %cst_40 = arith.constant 0.000000e+00 : f32
    %87 = vector.shape_cast %86 : vector<1x1xf32> to vector<1x1xf32>
    %88 = vector.broadcast %87 : vector<1x1xf32> to vector<1x5xf32>
    %89 = vector.broadcast %cst_40 : f32 to vector<1x5xf32>
    %90 = arith.select %81, %88, %89 : vector<1x5xi1>, vector<1x5xf32>
    %91 = arith.addf %67, %90 : vector<1x5xf32>
    %92 = arith.mulf %50, %79 : vector<10x1000xf32>
    %cst_41 = arith.constant dense<0.000000e+00> : vector<10xf32>
    %93 = vector.multi_reduction <add>, %92, %cst_41 [1] : vector<10x1000xf32> to vector<10xf32>
    %94 = vector.shape_cast %93 : vector<10xf32> to vector<10x1xf32>
    %cst_42 = arith.constant dense<0.000000e+00> : vector<1xf32>
    %95 = vector.multi_reduction <add>, %94, %cst_42 [0] : vector<10x1xf32> to vector<1xf32>
    %96 = vector.shape_cast %95 : vector<1xf32> to vector<1x1xf32>
    %cst_43 = arith.constant 0.000000e+00 : f32
    %97 = vector.shape_cast %96 : vector<1x1xf32> to vector<1x1xf32>
    %98 = vector.broadcast %97 : vector<1x1xf32> to vector<1x5xf32>
    %99 = vector.broadcast %cst_43 : f32 to vector<1x5xf32>
    %100 = arith.select %81, %98, %99 : vector<1x5xi1>, vector<1x5xf32>
    %101 = arith.addf %77, %100 : vector<1x5xf32>
    %c2 = arith.constant 2 : index
    %c0_44 = arith.constant 0 : index
    %c0_45 = arith.constant 0 : index
    %102 = vector.load %arg3[%c2, %c0_44, %c0_45] : memref<5x10x1000xf32, #tpu.memory_space<vmem>>, vector<1x10x1000xf32>
    %103 = vector.shape_cast %102 : vector<1x10x1000xf32> to vector<10x1000xf32>
    %c2_i32 = arith.constant 2 : i32
    %104 = vector.broadcast %c2_i32 : i32 to vector<1x5xi32>
    %105 = arith.cmpi eq, %51, %104 : vector<1x5xi32>
    %106 = arith.mulf %44, %103 : vector<10x1000xf32>
    %cst_46 = arith.constant dense<0.000000e+00> : vector<10xf32>
    %107 = vector.multi_reduction <add>, %106, %cst_46 [1] : vector<10x1000xf32> to vector<10xf32>
    %108 = vector.shape_cast %107 : vector<10xf32> to vector<10x1xf32>
    %cst_47 = arith.constant dense<0.000000e+00> : vector<1xf32>
    %109 = vector.multi_reduction <add>, %108, %cst_47 [0] : vector<10x1xf32> to vector<1xf32>
    %110 = vector.shape_cast %109 : vector<1xf32> to vector<1x1xf32>
    %cst_48 = arith.constant 0.000000e+00 : f32
    %111 = vector.shape_cast %110 : vector<1x1xf32> to vector<1x1xf32>
    %112 = vector.broadcast %111 : vector<1x1xf32> to vector<1x5xf32>
    %113 = vector.broadcast %cst_48 : f32 to vector<1x5xf32>
    %114 = arith.select %105, %112, %113 : vector<1x5xi1>, vector<1x5xf32>
    %115 = arith.addf %91, %114 : vector<1x5xf32>
    %116 = arith.mulf %50, %103 : vector<10x1000xf32>
    %cst_49 = arith.constant dense<0.000000e+00> : vector<10xf32>
    %117 = vector.multi_reduction <add>, %116, %cst_49 [1] : vector<10x1000xf32> to vector<10xf32>
    %118 = vector.shape_cast %117 : vector<10xf32> to vector<10x1xf32>
    %cst_50 = arith.constant dense<0.000000e+00> : vector<1xf32>
    %119 = vector.multi_reduction <add>, %118, %cst_50 [0] : vector<10x1xf32> to vector<1xf32>
    %120 = vector.shape_cast %119 : vector<1xf32> to vector<1x1xf32>
    %cst_51 = arith.constant 0.000000e+00 : f32
    %121 = vector.shape_cast %120 : vector<1x1xf32> to vector<1x1xf32>
    %122 = vector.broadcast %121 : vector<1x1xf32> to vector<1x5xf32>
    %123 = vector.broadcast %cst_51 : f32 to vector<1x5xf32>
    %124 = arith.select %105, %122, %123 : vector<1x5xi1>, vector<1x5xf32>
    %125 = arith.addf %101, %124 : vector<1x5xf32>
    %c3 = arith.constant 3 : index
    %c0_52 = arith.constant 0 : index
    %c0_53 = arith.constant 0 : index
    %126 = vector.load %arg3[%c3, %c0_52, %c0_53] : memref<5x10x1000xf32, #tpu.memory_space<vmem>>, vector<1x10x1000xf32>
    %127 = vector.shape_cast %126 : vector<1x10x1000xf32> to vector<10x1000xf32>
    %c3_i32 = arith.constant 3 : i32
    %128 = vector.broadcast %c3_i32 : i32 to vector<1x5xi32>
    %129 = arith.cmpi eq, %51, %128 : vector<1x5xi32>
    %130 = arith.mulf %44, %127 : vector<10x1000xf32>
    %cst_54 = arith.constant dense<0.000000e+00> : vector<10xf32>
    %131 = vector.multi_reduction <add>, %130, %cst_54 [1] : vector<10x1000xf32> to vector<10xf32>
    %132 = vector.shape_cast %131 : vector<10xf32> to vector<10x1xf32>
    %cst_55 = arith.constant dense<0.000000e+00> : vector<1xf32>
    %133 = vector.multi_reduction <add>, %132, %cst_55 [0] : vector<10x1xf32> to vector<1xf32>
    %134 = vector.shape_cast %133 : vector<1xf32> to vector<1x1xf32>
    %cst_56 = arith.constant 0.000000e+00 : f32
    %135 = vector.shape_cast %134 : vector<1x1xf32> to vector<1x1xf32>
    %136 = vector.broadcast %135 : vector<1x1xf32> to vector<1x5xf32>
    %137 = vector.broadcast %cst_56 : f32 to vector<1x5xf32>
    %138 = arith.select %129, %136, %137 : vector<1x5xi1>, vector<1x5xf32>
    %139 = arith.addf %115, %138 : vector<1x5xf32>
    %140 = arith.mulf %50, %127 : vector<10x1000xf32>
    %cst_57 = arith.constant dense<0.000000e+00> : vector<10xf32>
    %141 = vector.multi_reduction <add>, %140, %cst_57 [1] : vector<10x1000xf32> to vector<10xf32>
    %142 = vector.shape_cast %141 : vector<10xf32> to vector<10x1xf32>
    %cst_58 = arith.constant dense<0.000000e+00> : vector<1xf32>
    %143 = vector.multi_reduction <add>, %142, %cst_58 [0] : vector<10x1xf32> to vector<1xf32>
    %144 = vector.shape_cast %143 : vector<1xf32> to vector<1x1xf32>
    %cst_59 = arith.constant 0.000000e+00 : f32
    %145 = vector.shape_cast %144 : vector<1x1xf32> to vector<1x1xf32>
    %146 = vector.broadcast %145 : vector<1x1xf32> to vector<1x5xf32>
    %147 = vector.broadcast %cst_59 : f32 to vector<1x5xf32>
    %148 = arith.select %129, %146, %147 : vector<1x5xi1>, vector<1x5xf32>
    %149 = arith.addf %125, %148 : vector<1x5xf32>
    %c4 = arith.constant 4 : index
    %c0_60 = arith.constant 0 : index
    %c0_61 = arith.constant 0 : index
    %150 = vector.load %arg3[%c4, %c0_60, %c0_61] : memref<5x10x1000xf32, #tpu.memory_space<vmem>>, vector<1x10x1000xf32>
    %151 = vector.shape_cast %150 : vector<1x10x1000xf32> to vector<10x1000xf32>
    %c4_i32 = arith.constant 4 : i32
    %152 = vector.broadcast %c4_i32 : i32 to vector<1x5xi32>
    %153 = arith.cmpi eq, %51, %152 : vector<1x5xi32>
    %154 = arith.mulf %44, %151 : vector<10x1000xf32>
    %cst_62 = arith.constant dense<0.000000e+00> : vector<10xf32>
    %155 = vector.multi_reduction <add>, %154, %cst_62 [1] : vector<10x1000xf32> to vector<10xf32>
    %156 = vector.shape_cast %155 : vector<10xf32> to vector<10x1xf32>
    %cst_63 = arith.constant dense<0.000000e+00> : vector<1xf32>
    %157 = vector.multi_reduction <add>, %156, %cst_63 [0] : vector<10x1xf32> to vector<1xf32>
    %158 = vector.shape_cast %157 : vector<1xf32> to vector<1x1xf32>
    %cst_64 = arith.constant 0.000000e+00 : f32
    %159 = vector.shape_cast %158 : vector<1x1xf32> to vector<1x1xf32>
    %160 = vector.broadcast %159 : vector<1x1xf32> to vector<1x5xf32>
    %161 = vector.broadcast %cst_64 : f32 to vector<1x5xf32>
    %162 = arith.select %153, %160, %161 : vector<1x5xi1>, vector<1x5xf32>
    %163 = arith.addf %139, %162 : vector<1x5xf32>
    %164 = arith.mulf %50, %151 : vector<10x1000xf32>
    %cst_65 = arith.constant dense<0.000000e+00> : vector<10xf32>
    %165 = vector.multi_reduction <add>, %164, %cst_65 [1] : vector<10x1000xf32> to vector<10xf32>
    %166 = vector.shape_cast %165 : vector<10xf32> to vector<10x1xf32>
    %cst_66 = arith.constant dense<0.000000e+00> : vector<1xf32>
    %167 = vector.multi_reduction <add>, %166, %cst_66 [0] : vector<10x1xf32> to vector<1xf32>
    %168 = vector.shape_cast %167 : vector<1xf32> to vector<1x1xf32>
    %cst_67 = arith.constant 0.000000e+00 : f32
    %169 = vector.shape_cast %168 : vector<1x1xf32> to vector<1x1xf32>
    %170 = vector.broadcast %169 : vector<1x1xf32> to vector<1x5xf32>
    %171 = vector.broadcast %cst_67 : f32 to vector<1x5xf32>
    %172 = arith.select %153, %170, %171 : vector<1x5xi1>, vector<1x5xf32>
    %173 = arith.addf %149, %172 : vector<1x5xf32>
    %174 = arith.addf %163, %173 : vector<1x5xf32>
    %cst_68 = arith.constant 5.000000e-01 : f32
    %175 = vector.broadcast %cst_68 : f32 to vector<1x5xf32>
    %176 = arith.mulf %174, %175 : vector<1x5xf32>
    %177 = arith.subf %163, %176 : vector<1x5xf32>
    %178 = arith.subf %173, %176 : vector<1x5xf32>
    %179 = arith.mulf %177, %177 : vector<1x5xf32>
    %180 = arith.mulf %178, %178 : vector<1x5xf32>
    %181 = arith.addf %179, %180 : vector<1x5xf32>
    %cst_69 = arith.constant 5.000000e-01 : f32
    %182 = vector.broadcast %cst_69 : f32 to vector<1x5xf32>
    %183 = arith.mulf %181, %182 : vector<1x5xf32>
    %cst_70 = arith.constant 9.99999974E-6 : f32
    %184 = vector.broadcast %cst_70 : f32 to vector<1x5xf32>
    %185 = arith.addf %183, %184 : vector<1x5xf32>
    %186 = math.rsqrt %185 : vector<1x5xf32>
    %c0_71 = arith.constant 0 : index
    %c0_72 = arith.constant 0 : index
    %c0_73 = arith.constant 0 : index
    %187 = vector.load %arg4[%c0_71, %c0_72, %c0_73] : memref<3x1x5xf32, #tpu.memory_space<vmem>>, vector<1x1x5xf32>
    %188 = vector.shape_cast %187 : vector<1x1x5xf32> to vector<1x5xf32>
    %189 = arith.mulf %186, %188 : vector<1x5xf32>
    %190 = arith.mulf %177, %189 : vector<1x5xf32>
    %c1_74 = arith.constant 1 : index
    %c0_75 = arith.constant 0 : index
    %c0_76 = arith.constant 0 : index
    %191 = vector.load %arg4[%c1_74, %c0_75, %c0_76] : memref<3x1x5xf32, #tpu.memory_space<vmem>>, vector<1x1x5xf32>
    %192 = vector.shape_cast %191 : vector<1x1x5xf32> to vector<1x5xf32>
    %193 = arith.addf %190, %192 : vector<1x5xf32>
    %cst_77 = arith.constant 0.000000e+00 : f32
    %194 = vector.broadcast %cst_77 : f32 to vector<1x5xf32>
    %195 = arith.maximumf %193, %194 : vector<1x5xf32>
    %196 = arith.mulf %178, %189 : vector<1x5xf32>
    %c1_78 = arith.constant 1 : index
    %c0_79 = arith.constant 0 : index
    %c0_80 = arith.constant 0 : index
    %197 = vector.load %arg4[%c1_78, %c0_79, %c0_80] : memref<3x1x5xf32, #tpu.memory_space<vmem>>, vector<1x1x5xf32>
    %198 = vector.shape_cast %197 : vector<1x1x5xf32> to vector<1x5xf32>
    %199 = arith.addf %196, %198 : vector<1x5xf32>
    %cst_81 = arith.constant 0.000000e+00 : f32
    %200 = vector.broadcast %cst_81 : f32 to vector<1x5xf32>
    %201 = arith.maximumf %199, %200 : vector<1x5xf32>
    %c0_82 = arith.constant 0 : index
    %c0_83 = arith.constant 0 : index
    %202 = vector.load %arg5[%c0_82, %c0_83] : memref<5x2xf32, #tpu.memory_space<vmem>>, vector<5x2xf32>
    %c2_84 = arith.constant 2 : index
    %c0_85 = arith.constant 0 : index
    %c0_86 = arith.constant 0 : index
    %203 = vector.load %arg4[%c2_84, %c0_85, %c0_86] : memref<3x1x5xf32, #tpu.memory_space<vmem>>, vector<1x1x5xf32>
    %204 = vector.shape_cast %203 : vector<1x1x5xf32> to vector<1x5xf32>
    %205 = vector.extract_strided_slice %204 {offsets = [0, 0], sizes = [1, 2], strides = [1, 1]} : vector<1x5xf32> to vector<1x2xf32>
    %cst_87 = arith.constant dense<0.000000e+00> : vector<1x2xf32>
    %206 = tpu.matmul %195, %202, %cst_87 {dimension_numbers = #tpu.dot_dimension_numbers<[1], [0], [0], [1], [0, 0, 1, 1], [], []>} : vector<1x5xf32>, vector<5x2xf32>, vector<1x2xf32> -> vector<1x2xf32>
    %207 = arith.addf %206, %205 : vector<1x2xf32>
    %c0_88 = arith.constant 0 : index
    %c0_89 = arith.constant 0 : index
    %208 = vector.load %arg6[%c0_88, %c0_89] : memref<2x2xf32, #tpu.memory_space<vmem>>, vector<1x2xf32>
    tpu.vector_store %arg6[%c0_88, %c0_89], %207 {strides = array<i32>} : memref<2x2xf32, #tpu.memory_space<vmem>>, vector<1x2xf32>,
    %cst_90 = arith.constant dense<0.000000e+00> : vector<1x2xf32>
    %209 = tpu.matmul %201, %202, %cst_90 {dimension_numbers = #tpu.dot_dimension_numbers<[1], [0], [0], [1], [0, 0, 1, 1], [], []>} : vector<1x5xf32>, vector<5x2xf32>, vector<1x2xf32> -> vector<1x2xf32>
    %210 = arith.addf %209, %205 : vector<1x2xf32>
    %c1_91 = arith.constant 1 : index
    %c0_92 = arith.constant 0 : index
    %211 = vector.load %arg6[%c1_91, %c0_92] : memref<2x2xf32, #tpu.memory_space<vmem>>, vector<1x2xf32>
    tpu.vector_store %arg6[%c1_91, %c0_92], %210 {strides = array<i32>} : memref<2x2xf32, #tpu.memory_space<vmem>>, vector<1x2xf32>,
    return
  }
}

</mosaic_0001>

<llo_original>
// kernel: tpu_custom_call.1
$region0: #{tpu_custom_call.1}
  #allocation0 [shape = 'u32[]', space=smem, size = 0x4, offset = 0x4, fixed_abs, tag = 'smem constant byte address 0x4 - core index']
  #allocation1 [shape = 'u32[144,128]{1,0:T(1,128)}', space=vmem, size = 0x12000, scoped, tag = 'internal scratch']
  %s0 = inlined_call_operand.vmem [shape: bf16[2,84,1000], index: 0, kind: input, shape index: {}]
  %s1 = inlined_call_operand.vmem [shape: bf16[10,84], index: 1, kind: input, shape index: {}]
  %s2 = inlined_call_operand.vmem [shape: f32[2,10,1], index: 2, kind: input, shape index: {}]
  %s3 = inlined_call_operand.vmem [shape: f32[5,10,1000], index: 3, kind: input, shape index: {}]
  %s4 = inlined_call_operand.vmem [shape: f32[3,1,5], index: 4, kind: input, shape index: {}]
  %s5 = inlined_call_operand.vmem [shape: f32[5,2], index: 5, kind: input, shape index: {}]
  %s6 = inlined_call_operand.hbm [shape: f32[2,2], index: 6, kind: output, shape index: {}]
  %s7 = sld [smem:[#allocation0]]
  $region34: #{tpu_custom_call.1} parent=0
    _
  %s9 = ssub.s32 1, %s7
  %s10 = scalar_select 0, %s9, %s7
  $region1: #{tpu_custom_call.1} parent=0
    #allocation2 [shape = 'u8[1024]{0}', space=vmem, size = 0x400, scoped, tag = 'output window, operand 0, single buffered']
    #allocation3 [shape = 's32[1]{0}', space=sflag, size = 0x4, scoped, tag = 'scoped memory for tpu_custom_call.1']
    %11 = vsyncpa [#allocation3], 0
    // Predicated region
    $region2: #{tpu_custom_call.1} parent=1 // pred_check
      _
    $region3: #{tpu_custom_call.1} parent=1 // pred_check_branch
      %13 = sbr.rel (0) target = $region5
    $region4: #{tpu_custom_call.1} parent=1 // pred_region
      _
    $region5: #{tpu_custom_call.1} parent=1 // pred_fallthru
      _
    // Predicated region
    $region6: #{tpu_custom_call.1} parent=1 // pred_check
      _
    $region7: #{tpu_custom_call.1} parent=1 // pred_check_branch
      %15 = sbr.rel (0) target = $region9
    $region8: #{tpu_custom_call.1} parent=1 // pred_region
      _
    $region9: #{tpu_custom_call.1} parent=1 // pred_fallthru
      _
    // Predicated region
    $region10: #{tpu_custom_call.1} parent=1 // pred_check
      _
    $region11: #{tpu_custom_call.1} parent=1 // pred_check_branch
      %17 = sbr.rel (0) target = $region13
    $region12: #{tpu_custom_call.1} parent=1 // pred_region
      _
    $region13: #{tpu_custom_call.1} parent=1 // pred_fallthru
      _
    // Predicated region
    $region14: #{tpu_custom_call.1} parent=1 // pred_check
      _
    $region15: #{tpu_custom_call.1} parent=1 // pred_check_branch
      %19 = sbr.rel (0) target = $region17
    $region16: #{tpu_custom_call.1} parent=1 // pred_region
      _
    $region17: #{tpu_custom_call.1} parent=1 // pred_fallthru
      _
    // Predicated region
    $region18: #{tpu_custom_call.1} parent=1 // pred_check
      _
    $region19: #{tpu_custom_call.1} parent=1 // pred_check_branch
      %21 = sbr.rel (0) target = $region21
    $region20: #{tpu_custom_call.1} parent=1 // pred_region
      _
    $region21: #{tpu_custom_call.1} parent=1 // pred_fallthru
      _
    // Predicated region
    $region22: #{tpu_custom_call.1} parent=1 // pred_check
      _
    $region23: #{tpu_custom_call.1} parent=1 // pred_check_branch
      %23 = sbr.rel (0) target = $region25
    $region24: #{tpu_custom_call.1} parent=1 // pred_region
      _
    $region25: #{tpu_custom_call.1} parent=1 // pred_fallthru
      _
    %v25 = vld [vmem:[%s1] sm:$0xf]
    %v26 = vld [vmem:[%s1 + $0x4] sm:$0x1]
    %v27 = vld [vmem:[%s0] sm:$0xff]
    %v28 = vld [vmem:[%s0 + $0x8] sm:$0xff]
    %v29 = vld [vmem:[%s0 + $0x10] sm:$0xff]
    %v30 = vld [vmem:[%s0 + $0x18] sm:$0xff]
    %v31 = vld [vmem:[%s0 + $0x20] sm:$0xff]
    %v32 = vld [vmem:[%s0 + $0x28] sm:$0xff]
    %v33 = vld [vmem:[%s0 + $0x30] sm:$0xff]
    %v34 = vld [vmem:[%s0 + $0x38] sm:$0xff]
    %v35 = vld [vmem:[%s0 + $0x40] sm:$0xff]
    %v36 = vld [vmem:[%s0 + $0x48] sm:$0xff]
    %v37 = vld [vmem:[%s0 + $0x50] sm:$0xff]
    %v38 = vld [vmem:[%s0 + $0x58] sm:$0xff]
    %v39 = vld [vmem:[%s0 + $0x60] sm:$0xff]
    %v40 = vld [vmem:[%s0 + $0x68] sm:$0xff]
    %v41 = vld [vmem:[%s0 + $0x70] sm:$0xff]
    %v42 = vld [vmem:[%s0 + $0x78] sm:$0xff]
    %v43 = vld [vmem:[%s0 + $0x80] sm:$0xff]
    %v44 = vld [vmem:[%s0 + $0x88] sm:$0xff]
    %v45 = vld [vmem:[%s0 + $0x90] sm:$0xff]
    %v46 = vld [vmem:[%s0 + $0x98] sm:$0xff]
    %v47 = vld [vmem:[%s0 + $0xa0] sm:$0xff]
    %v48 = vld [vmem:[%s0 + $0xa8] sm:$0xff]
    %v49 = vld [vmem:[%s0 + $0xb0] sm:$0xff]
    %v50 = vld [vmem:[%s0 + $0xb8] sm:$0xff]
    %v51 = vld [vmem:[%s0 + $0xc0] sm:$0xff]
    %v52 = vld [vmem:[%s0 + $0xc8] sm:$0xff]
    %v53 = vld [vmem:[%s0 + $0xd0] sm:$0xff]
    %v54 = vld [vmem:[%s0 + $0xd8] sm:$0xff]
    %v55 = vld [vmem:[%s0 + $0xe0] sm:$0xff]
    %v56 = vld [vmem:[%s0 + $0xe8] sm:$0xff]
    %v57 = vld [vmem:[%s0 + $0xf0] sm:$0xff]
    %v58 = vld [vmem:[%s0 + $0xf8] sm:$0xff]
    %v59 = vld [vmem:[%s0 + $0x100] sm:$0xff]
    %v60 = vld [vmem:[%s0 + $0x108] sm:$0xff]
    %v61 = vld [vmem:[%s0 + $0x110] sm:$0xff]
    %v62 = vld [vmem:[%s0 + $0x118] sm:$0xff]
    %v63 = vld [vmem:[%s0 + $0x120] sm:$0xff]
    %v64 = vld [vmem:[%s0 + $0x128] sm:$0xff]
    %v65 = vld [vmem:[%s0 + $0x130] sm:$0xff]
    %v66 = vld [vmem:[%s0 + $0x138] sm:$0xff]
    %v67 = vld [vmem:[%s0 + $0x140] sm:$0x33]
    %v68 = vld [vmem:[%s0 + $0x148] sm:$0x33]
    %v69 = vld [vmem:[%s0 + $0x150] sm:$0x33]
    %v70 = vld [vmem:[%s0 + $0x158] sm:$0x33]
    %v73 = vunpack.c.l.b16 %v25
    %v74 = vunpack.c.l.b16 %v26
    %v75 = vpack.c.b16 %v74, %v73
    %v120 = vunpack.c.l.b16 %v27
    %v121 = vunpack.c.h.b16 %v27
    %v122 = vunpack.c.l.b16 %v28
    %v123 = vunpack.c.h.b16 %v28
    %v124 = vunpack.c.l.b16 %v29
    %v125 = vunpack.c.h.b16 %v29
    %v126 = vunpack.c.l.b16 %v30
    %v127 = vunpack.c.h.b16 %v30
    %v128 = vunpack.c.l.b16 %v31
    %v129 = vunpack.c.h.b16 %v31
    %v130 = vunpack.c.l.b16 %v32
    %v131 = vunpack.c.h.b16 %v32
    %v132 = vunpack.c.l.b16 %v33
    %v133 = vunpack.c.h.b16 %v33
    %v134 = vunpack.c.l.b16 %v34
    %v135 = vunpack.c.h.b16 %v34
    %v136 = vunpack.c.l.b16 %v35
    %v137 = vunpack.c.h.b16 %v35
    %v138 = vunpack.c.l.b16 %v36
    %v139 = vunpack.c.h.b16 %v36
    %v140 = vunpack.c.l.b16 %v37
    %v141 = vunpack.c.h.b16 %v37
    %v142 = vunpack.c.l.b16 %v38
    %v143 = vunpack.c.h.b16 %v38
    %v144 = vunpack.c.l.b16 %v39
    %v145 = vunpack.c.h.b16 %v39
    %v146 = vunpack.c.l.b16 %v40
    %v147 = vunpack.c.h.b16 %v40
    %v148 = vunpack.c.l.b16 %v41
    %v149 = vunpack.c.h.b16 %v41
    %v150 = vunpack.c.l.b16 %v42
    %v151 = vunpack.c.h.b16 %v42
    %v152 = vunpack.c.l.b16 %v43
    %v153 = vunpack.c.h.b16 %v43
    %v154 = vunpack.c.l.b16 %v44
    %v155 = vunpack.c.h.b16 %v44
    %v156 = vunpack.c.l.b16 %v45
    %v157 = vunpack.c.h.b16 %v45
    %v158 = vunpack.c.l.b16 %v46
    %v159 = vunpack.c.h.b16 %v46
    %v160 = vunpack.c.l.b16 %v47
    %v161 = vunpack.c.h.b16 %v47
    %v162 = vunpack.c.l.b16 %v48
    %v163 = vunpack.c.h.b16 %v48
    %v164 = vunpack.c.l.b16 %v49
    %v165 = vunpack.c.h.b16 %v49
    %v166 = vunpack.c.l.b16 %v50
    %v167 = vunpack.c.h.b16 %v50
    %v168 = vunpack.c.l.b16 %v51
    %v169 = vunpack.c.h.b16 %v51
    %v170 = vunpack.c.l.b16 %v52
    %v171 = vunpack.c.h.b16 %v52
    %v172 = vunpack.c.l.b16 %v53
    %v173 = vunpack.c.h.b16 %v53
    %v174 = vunpack.c.l.b16 %v54
    %v175 = vunpack.c.h.b16 %v54
    %v176 = vunpack.c.l.b16 %v55
    %v177 = vunpack.c.h.b16 %v55
    %v178 = vunpack.c.l.b16 %v56
    %v179 = vunpack.c.h.b16 %v56
    %v180 = vunpack.c.l.b16 %v57
    %v181 = vunpack.c.h.b16 %v57
    %v182 = vunpack.c.l.b16 %v58
    %v183 = vunpack.c.h.b16 %v58
    %v184 = vunpack.c.l.b16 %v59
    %v185 = vunpack.c.h.b16 %v59
    %v186 = vunpack.c.l.b16 %v60
    %v187 = vunpack.c.h.b16 %v60
    %v188 = vunpack.c.l.b16 %v61
    %v189 = vunpack.c.h.b16 %v61
    %v190 = vunpack.c.l.b16 %v62
    %v191 = vunpack.c.h.b16 %v62
    %v192 = vunpack.c.l.b16 %v63
    %v193 = vunpack.c.h.b16 %v63
    %v194 = vunpack.c.l.b16 %v64
    %v195 = vunpack.c.h.b16 %v64
    %v196 = vunpack.c.l.b16 %v65
    %v197 = vunpack.c.h.b16 %v65
    %v198 = vunpack.c.l.b16 %v66
    %v199 = vunpack.c.h.b16 %v66
    %v200 = vunpack.c.l.b16 %v67
    %v201 = vunpack.c.h.b16 %v67
    %v202 = vunpack.c.l.b16 %v68
    %v203 = vunpack.c.h.b16 %v68
    %v204 = vunpack.c.l.b16 %v69
    %v205 = vunpack.c.h.b16 %v69
    %v206 = vunpack.c.l.b16 %v70
    %v207 = vunpack.c.h.b16 %v70
    %v208 = vpack.c.b16 %v128, %v120
    %v209 = vpack.c.b16 %v129, %v121
    %v210 = vpack.c.b16 %v130, %v122
    %v211 = vpack.c.b16 %v131, %v123
    %v212 = vpack.c.b16 %v132, %v124
    %v213 = vpack.c.b16 %v133, %v125
    %v214 = vpack.c.b16 %v134, %v126
    %v215 = vpack.c.b16 %v135, %v127
    %v216 = vpack.c.b16 %v144, %v136
    %v217 = vpack.c.b16 %v145, %v137
    %v218 = vpack.c.b16 %v146, %v138
    %v219 = vpack.c.b16 %v147, %v139
    %v220 = vpack.c.b16 %v148, %v140
    %v221 = vpack.c.b16 %v149, %v141
    %v222 = vpack.c.b16 %v150, %v142
    %v223 = vpack.c.b16 %v151, %v143
    %v224 = vpack.c.b16 %v160, %v152
    %v225 = vpack.c.b16 %v161, %v153
    %v226 = vpack.c.b16 %v162, %v154
    %v227 = vpack.c.b16 %v163, %v155
    %v228 = vpack.c.b16 %v164, %v156
    %v229 = vpack.c.b16 %v165, %v157
    %v230 = vpack.c.b16 %v166, %v158
    %v231 = vpack.c.b16 %v167, %v159
    %v232 = vpack.c.b16 %v176, %v168
    %v233 = vpack.c.b16 %v177, %v169
    %v234 = vpack.c.b16 %v178, %v170
    %v235 = vpack.c.b16 %v179, %v171
    %v236 = vpack.c.b16 %v180, %v172
    %v237 = vpack.c.b16 %v181, %v173
    %v238 = vpack.c.b16 %v182, %v174
    %v239 = vpack.c.b16 %v183, %v175
    %v240 = vpack.c.b16 %v192, %v184
    %v241 = vpack.c.b16 %v193, %v185
    %v242 = vpack.c.b16 %v194, %v186
    %v243 = vpack.c.b16 %v195, %v187
    %v244 = vpack.c.b16 %v196, %v188
    %v245 = vpack.c.b16 %v197, %v189
    %v246 = vpack.c.b16 %v198, %v190
    %v247 = vpack.c.b16 %v199, %v191
    %v248 = vpack.c.b16 %v200, %v200
    %v249 = vpack.c.b16 %v201, %v201
    %v250 = vpack.c.b16 %v202, %v202
    %v251 = vpack.c.b16 %v203, %v203
    %v252 = vpack.c.b16 %v204, %v204
    %v253 = vpack.c.b16 %v205, %v205
    %v254 = vpack.c.b16 %v206, %v206
    %v255 = vpack.c.b16 %v207, %v207
    %vm296 = vcmask 687104
    %v298 = vsel %vm296, %v75, 0
    %vm300 = vcmask 1041408
    %v302 = vsel %vm300, %v248, 0
    %v305 = vsel %vm300, %v249, 0
    %v308 = vsel %vm300, %v250, 0
    %v311 = vsel %vm300, %v251, 0
    %v314 = vsel %vm300, %v252, 0
    %v317 = vsel %vm300, %v253, 0
    %v320 = vsel %vm300, %v254, 0
    %v323 = vsel %vm300, %v255, 0
    %325 = vmatprep.subr.bf16.mxu0 %v209
    %326 = vmatpush1.bf16.msra.mxu0 %v208
    %327 = vmatprep.subr.bf16.mxu0 %v217
    %328 = vmatpush1.bf16.msra.mxu0 %v216
    %329 = vmatprep.subr.bf16.mxu0 %v225
    %330 = vmatpush1.bf16.msra.mxu0 %v224
    %331 = vmatprep.subr.bf16.mxu0 %v233
    %332 = vmatpush1.bf16.msra.mxu0 %v232
    %333 = vmatprep.subr.bf16.mxu0 %v241
    %334 = vmatpush1.bf16.msra.mxu0 %v240
    %335 = vmatprep.subr.bf16.mxu0 %v305
    %336 = vmatpush1.bf16.msra.mxu0 %v302
    %337 = vmatprep.subr.bf16.mxu0 0
    %338 = vmatpush1.bf16.msra.mxu0 0
    %339 = vmatprep.subr.bf16.mxu0 0
    %340 = vmatpush1.bf16.msra.mxu0 0
    %341 = vmatprep.subr.bf16.mxu0 0
    %342 = vmatpush1.bf16.msra.mxu0 0
    %343 = vmatprep.subr.bf16.mxu0 0
    %344 = vmatpush1.bf16.msra.mxu0 0
    %345 = vmatprep.subr.bf16.mxu0 0
    %346 = vmatpush1.bf16.msra.mxu0 0
    %347 = vmatprep.subr.bf16.mxu0 0
    %348 = vmatpush1.bf16.msra.mxu0 0
    %349 = vmatprep.subr.bf16.mxu0 0
    %350 = vmatpush1.bf16.msra.mxu0 0
    %351 = vmatprep.subr.bf16.mxu0 0
    %352 = vmatpush1.bf16.msra.mxu0 0
    %353 = vmatprep.subr.bf16.mxu0 0
    %354 = vmatpush1.bf16.msra.mxu0 0
    %355 = vmatprep.subr.bf16.mxu0 0
    %356 = vmatpush1.bf16.msra.mxu0 0
    %357 = vmatprep.mubr.bf16.mxu0 0
    %358 = vmatmul.mubr.bf16.gmra.mrb[0].mxu0 %v298
    %v359 = vpop.f32.mrb[0].mxu0
    %v360 = vadd.f32 0.0, %v359
    %v361 = vpop.f32.mrb[0].mxu0
    %v362 = vadd.f32 0.0, %v361
    %v363 = vpop.f32.mrb[0].mxu0
    %v364 = vadd.f32 0.0, %v363
    %v365 = vpop.f32.mrb[0].mxu0
    %v366 = vadd.f32 0.0, %v365
    %367 = vdwg.mxu0
    %368 = vmatprep.subr.bf16.mxu0 %v211
    %369 = vmatpush1.bf16.msra.mxu0 %v210
    %370 = vmatprep.subr.bf16.mxu0 %v219
    %371 = vmatpush1.bf16.msra.mxu0 %v218
    %372 = vmatprep.subr.bf16.mxu0 %v227
    %373 = vmatpush1.bf16.msra.mxu0 %v226
    %374 = vmatprep.subr.bf16.mxu0 %v235
    %375 = vmatpush1.bf16.msra.mxu0 %v234
    %376 = vmatprep.subr.bf16.mxu0 %v243
    %377 = vmatpush1.bf16.msra.mxu0 %v242
    %378 = vmatprep.subr.bf16.mxu0 %v311
    %379 = vmatpush1.bf16.msra.mxu0 %v308
    %380 = vmatprep.subr.bf16.mxu0 0
    %381 = vmatpush1.bf16.msra.mxu0 0
    %382 = vmatprep.subr.bf16.mxu0 0
    %383 = vmatpush1.bf16.msra.mxu0 0
    %384 = vmatprep.subr.bf16.mxu0 0
    %385 = vmatpush1.bf16.msra.mxu0 0
    %386 = vmatprep.subr.bf16.mxu0 0
    %387 = vmatpush1.bf16.msra.mxu0 0
    %388 = vmatprep.subr.bf16.mxu0 0
    %389 = vmatpush1.bf16.msra.mxu0 0
    %390 = vmatprep.subr.bf16.mxu0 0
    %391 = vmatpush1.bf16.msra.mxu0 0
    %392 = vmatprep.subr.bf16.mxu0 0
    %393 = vmatpush1.bf16.msra.mxu0 0
    %394 = vmatprep.subr.bf16.mxu0 0
    %395 = vmatpush1.bf16.msra.mxu0 0
    %396 = vmatprep.subr.bf16.mxu0 0
    %397 = vmatpush1.bf16.msra.mxu0 0
    %398 = vmatprep.subr.bf16.mxu0 0
    %399 = vmatpush1.bf16.msra.mxu0 0
    %400 = vmatprep.mubr.bf16.mxu0 0
    %401 = vmatmul.mubr.bf16.gmra.mrb[0].mxu0 %v298
    %v402 = vpop.f32.mrb[0].mxu0
    %v403 = vadd.f32 0.0, %v402
    %v404 = vpop.f32.mrb[0].mxu0
    %v405 = vadd.f32 0.0, %v404
    %v406 = vpop.f32.mrb[0].mxu0
    %v407 = vadd.f32 0.0, %v406
    %v408 = vpop.f32.mrb[0].mxu0
    %v409 = vadd.f32 0.0, %v408
    %410 = vdwg.mxu0
    %411 = vmatprep.subr.bf16.mxu0 %v213
    %412 = vmatpush1.bf16.msra.mxu0 %v212
    %413 = vmatprep.subr.bf16.mxu0 %v221
    %414 = vmatpush1.bf16.msra.mxu0 %v220
    %415 = vmatprep.subr.bf16.mxu0 %v229
    %416 = vmatpush1.bf16.msra.mxu0 %v228
    %417 = vmatprep.subr.bf16.mxu0 %v237
    %418 = vmatpush1.bf16.msra.mxu0 %v236
    %419 = vmatprep.subr.bf16.mxu0 %v245
    %420 = vmatpush1.bf16.msra.mxu0 %v244
    %421 = vmatprep.subr.bf16.mxu0 %v317
    %422 = vmatpush1.bf16.msra.mxu0 %v314
    %423 = vmatprep.subr.bf16.mxu0 0
    %424 = vmatpush1.bf16.msra.mxu0 0
    %425 = vmatprep.subr.bf16.mxu0 0
    %426 = vmatpush1.bf16.msra.mxu0 0
    %427 = vmatprep.subr.bf16.mxu0 0
    %428 = vmatpush1.bf16.msra.mxu0 0
    %429 = vmatprep.subr.bf16.mxu0 0
    %430 = vmatpush1.bf16.msra.mxu0 0
    %431 = vmatprep.subr.bf16.mxu0 0
    %432 = vmatpush1.bf16.msra.mxu0 0
    %433 = vmatprep.subr.bf16.mxu0 0
    %434 = vmatpush1.bf16.msra.mxu0 0
    %435 = vmatprep.subr.bf16.mxu0 0
    %436 = vmatpush1.bf16.msra.mxu0 0
    %437 = vmatprep.subr.bf16.mxu0 0
    %438 = vmatpush1.bf16.msra.mxu0 0
    %439 = vmatprep.subr.bf16.mxu0 0
    %440 = vmatpush1.bf16.msra.mxu0 0
    %441 = vmatprep.subr.bf16.mxu0 0
    %442 = vmatpush1.bf16.msra.mxu0 0
    %443 = vmatprep.mubr.bf16.mxu0 0
    %444 = vmatmul.mubr.bf16.gmra.mrb[0].mxu0 %v298
    %v445 = vpop.f32.mrb[0].mxu0
    %v446 = vadd.f32 0.0, %v445
    %v447 = vpop.f32.mrb[0].mxu0
    %v448 = vadd.f32 0.0, %v447
    %v449 = vpop.f32.mrb[0].mxu0
    %v450 = vadd.f32 0.0, %v449
    %v451 = vpop.f32.mrb[0].mxu0
    %v452 = vadd.f32 0.0, %v451
    %453 = vdwg.mxu0
    %454 = vmatprep.subr.bf16.mxu0 %v215
    %455 = vmatpush1.bf16.msra.mxu0 %v214
    %456 = vmatprep.subr.bf16.mxu0 %v223
    %457 = vmatpush1.bf16.msra.mxu0 %v222
    %458 = vmatprep.subr.bf16.mxu0 %v231
    %459 = vmatpush1.bf16.msra.mxu0 %v230
    %460 = vmatprep.subr.bf16.mxu0 %v239
    %461 = vmatpush1.bf16.msra.mxu0 %v238
    %462 = vmatprep.subr.bf16.mxu0 %v247
    %463 = vmatpush1.bf16.msra.mxu0 %v246
    %464 = vmatprep.subr.bf16.mxu0 %v323
    %465 = vmatpush1.bf16.msra.mxu0 %v320
    %466 = vmatprep.subr.bf16.mxu0 0
    %467 = vmatpush1.bf16.msra.mxu0 0
    %468 = vmatprep.subr.bf16.mxu0 0
    %469 = vmatpush1.bf16.msra.mxu0 0
    %470 = vmatprep.subr.bf16.mxu0 0
    %471 = vmatpush1.bf16.msra.mxu0 0
    %472 = vmatprep.subr.bf16.mxu0 0
    %473 = vmatpush1.bf16.msra.mxu0 0
    %474 = vmatprep.subr.bf16.mxu0 0
    %475 = vmatpush1.bf16.msra.mxu0 0
    %476 = vmatprep.subr.bf16.mxu0 0
    %477 = vmatpush1.bf16.msra.mxu0 0
    %478 = vmatprep.subr.bf16.mxu0 0
    %479 = vmatpush1.bf16.msra.mxu0 0
    %480 = vmatprep.subr.bf16.mxu0 0
    %481 = vmatpush1.bf16.msra.mxu0 0
    %482 = vmatprep.subr.bf16.mxu0 0
    %483 = vmatpush1.bf16.msra.mxu0 0
    %484 = vmatprep.subr.bf16.mxu0 0
    %485 = vmatpush1.bf16.msra.mxu0 0
    %486 = vmatprep.mubr.bf16.mxu0 0
    %487 = vmatmul.mubr.bf16.gmra.mrb[0].mxu0 %v298
    %v488 = vpop.f32.mrb[0].mxu0
    %v489 = vadd.f32 0.0, %v488
    %v490 = vpop.f32.mrb[0].mxu0
    %v491 = vadd.f32 0.0, %v490
    %v492 = vpop.f32.mrb[0].mxu0
    %v493 = vadd.f32 0.0, %v492
    %v494 = vpop.f32.mrb[0].mxu0
    %v495 = vadd.f32 0.0, %v494
    %496 = vdwg.mxu0
    %s497 = scalar_lea.vmem %s0, 352
    %v498 = vld [vmem:[%s497] sm:$0xff]
    %v499 = vld [vmem:[%s497 + $0x8] sm:$0xff]
    %v500 = vld [vmem:[%s497 + $0x10] sm:$0xff]
    %v501 = vld [vmem:[%s497 + $0x18] sm:$0xff]
    %v502 = vld [vmem:[%s497 + $0x20] sm:$0xff]
    %v503 = vld [vmem:[%s497 + $0x28] sm:$0xff]
    %v504 = vld [vmem:[%s497 + $0x30] sm:$0xff]
    %v505 = vld [vmem:[%s497 + $0x38] sm:$0xff]
    %v506 = vld [vmem:[%s497 + $0x40] sm:$0xff]
    %v507 = vld [vmem:[%s497 + $0x48] sm:$0xff]
    %v508 = vld [vmem:[%s497 + $0x50] sm:$0xff]
    %v509 = vld [vmem:[%s497 + $0x58] sm:$0xff]
    %v510 = vld [vmem:[%s497 + $0x60] sm:$0xff]
    %v511 = vld [vmem:[%s497 + $0x68] sm:$0xff]
    %v512 = vld [vmem:[%s497 + $0x70] sm:$0xff]
    %v513 = vld [vmem:[%s497 + $0x78] sm:$0xff]
    %v514 = vld [vmem:[%s497 + $0x80] sm:$0xff]
    %v515 = vld [vmem:[%s497 + $0x88] sm:$0xff]
    %v516 = vld [vmem:[%s497 + $0x90] sm:$0xff]
    %v517 = vld [vmem:[%s497 + $0x98] sm:$0xff]
    %v518 = vld [vmem:[%s497 + $0xa0] sm:$0xff]
    %v519 = vld [vmem:[%s497 + $0xa8] sm:$0xff]
    %v520 = vld [vmem:[%s497 + $0xb0] sm:$0xff]
    %v521 = vld [vmem:[%s497 + $0xb8] sm:$0xff]
    %v522 = vld [vmem:[%s497 + $0xc0] sm:$0xff]
    %v523 = vld [vmem:[%s497 + $0xc8] sm:$0xff]
    %v524 = vld [vmem:[%s497 + $0xd0] sm:$0xff]
    %v525 = vld [vmem:[%s497 + $0xd8] sm:$0xff]
    %v526 = vld [vmem:[%s497 + $0xe0] sm:$0xff]
    %v527 = vld [vmem:[%s497 + $0xe8] sm:$0xff]
    %v528 = vld [vmem:[%s497 + $0xf0] sm:$0xff]
    %v529 = vld [vmem:[%s497 + $0xf8] sm:$0xff]
    %v530 = vld [vmem:[%s497 + $0x100] sm:$0xff]
    %v531 = vld [vmem:[%s497 + $0x108] sm:$0xff]
    %v532 = vld [vmem:[%s497 + $0x110] sm:$0xff]
    %v533 = vld [vmem:[%s497 + $0x118] sm:$0xff]
    %v534 = vld [vmem:[%s497 + $0x120] sm:$0xff]
    %v535 = vld [vmem:[%s497 + $0x128] sm:$0xff]
    %v536 = vld [vmem:[%s497 + $0x130] sm:$0xff]
    %v537 = vld [vmem:[%s497 + $0x138] sm:$0xff]
    %v538 = vld [vmem:[%s497 + $0x140] sm:$0x33]
    %v539 = vld [vmem:[%s497 + $0x148] sm:$0x33]
    %v540 = vld [vmem:[%s497 + $0x150] sm:$0x33]
    %v541 = vld [vmem:[%s497 + $0x158] sm:$0x33]
    %v586 = vunpack.c.l.b16 %v498
    %v587 = vunpack.c.h.b16 %v498
    %v588 = vunpack.c.l.b16 %v499
    %v589 = vunpack.c.h.b16 %v499
    %v590 = vunpack.c.l.b16 %v500
    %v591 = vunpack.c.h.b16 %v500
    %v592 = vunpack.c.l.b16 %v501
    %v593 = vunpack.c.h.b16 %v501
    %v594 = vunpack.c.l.b16 %v502
    %v595 = vunpack.c.h.b16 %v502
    %v596 = vunpack.c.l.b16 %v503
    %v597 = vunpack.c.h.b16 %v503
    %v598 = vunpack.c.l.b16 %v504
    %v599 = vunpack.c.h.b16 %v504
    %v600 = vunpack.c.l.b16 %v505
    %v601 = vunpack.c.h.b16 %v505
    %v602 = vunpack.c.l.b16 %v506
    %v603 = vunpack.c.h.b16 %v506
    %v604 = vunpack.c.l.b16 %v507
    %v605 = vunpack.c.h.b16 %v507
    %v606 = vunpack.c.l.b16 %v508
    %v607 = vunpack.c.h.b16 %v508
    %v608 = vunpack.c.l.b16 %v509
    %v609 = vunpack.c.h.b16 %v509
    %v610 = vunpack.c.l.b16 %v510
    %v611 = vunpack.c.h.b16 %v510
    %v612 = vunpack.c.l.b16 %v511
    %v613 = vunpack.c.h.b16 %v511
    %v614 = vunpack.c.l.b16 %v512
    %v615 = vunpack.c.h.b16 %v512
    %v616 = vunpack.c.l.b16 %v513
    %v617 = vunpack.c.h.b16 %v513
    %v618 = vunpack.c.l.b16 %v514
    %v619 = vunpack.c.h.b16 %v514
    %v620 = vunpack.c.l.b16 %v515
    %v621 = vunpack.c.h.b16 %v515
    %v622 = vunpack.c.l.b16 %v516
    %v623 = vunpack.c.h.b16 %v516
    %v624 = vunpack.c.l.b16 %v517
    %v625 = vunpack.c.h.b16 %v517
    %v626 = vunpack.c.l.b16 %v518
    %v627 = vunpack.c.h.b16 %v518
    %v628 = vunpack.c.l.b16 %v519
    %v629 = vunpack.c.h.b16 %v519
    %v630 = vunpack.c.l.b16 %v520
    %v631 = vunpack.c.h.b16 %v520
    %v632 = vunpack.c.l.b16 %v521
    %v633 = vunpack.c.h.b16 %v521
    %v634 = vunpack.c.l.b16 %v522
    %v635 = vunpack.c.h.b16 %v522
    %v636 = vunpack.c.l.b16 %v523
    %v637 = vunpack.c.h.b16 %v523
    %v638 = vunpack.c.l.b16 %v524
    %v639 = vunpack.c.h.b16 %v524
    %v640 = vunpack.c.l.b16 %v525
    %v641 = vunpack.c.h.b16 %v525
    %v642 = vunpack.c.l.b16 %v526
    %v643 = vunpack.c.h.b16 %v526
    %v644 = vunpack.c.l.b16 %v527
    %v645 = vunpack.c.h.b16 %v527
    %v646 = vunpack.c.l.b16 %v528
    %v647 = vunpack.c.h.b16 %v528
    %v648 = vunpack.c.l.b16 %v529
    %v649 = vunpack.c.h.b16 %v529
    %v650 = vunpack.c.l.b16 %v530
    %v651 = vunpack.c.h.b16 %v530
    %v652 = vunpack.c.l.b16 %v531
    %v653 = vunpack.c.h.b16 %v531
    %v654 = vunpack.c.l.b16 %v532
    %v655 = vunpack.c.h.b16 %v532
    %v656 = vunpack.c.l.b16 %v533
    %v657 = vunpack.c.h.b16 %v533
    %v658 = vunpack.c.l.b16 %v534
    %v659 = vunpack.c.h.b16 %v534
    %v660 = vunpack.c.l.b16 %v535
    %v661 = vunpack.c.h.b16 %v535
    %v662 = vunpack.c.l.b16 %v536
    %v663 = vunpack.c.h.b16 %v536
    %v664 = vunpack.c.l.b16 %v537
    %v665 = vunpack.c.h.b16 %v537
    %v666 = vunpack.c.l.b16 %v538
    %v667 = vunpack.c.h.b16 %v538
    %v668 = vunpack.c.l.b16 %v539
    %v669 = vunpack.c.h.b16 %v539
    %v670 = vunpack.c.l.b16 %v540
    %v671 = vunpack.c.h.b16 %v540
    %v672 = vunpack.c.l.b16 %v541
    %v673 = vunpack.c.h.b16 %v541
    %v674 = vpack.c.b16 %v594, %v586
    %v675 = vpack.c.b16 %v595, %v587
    %v676 = vpack.c.b16 %v596, %v588
    %v677 = vpack.c.b16 %v597, %v589
    %v678 = vpack.c.b16 %v598, %v590
    %v679 = vpack.c.b16 %v599, %v591
    %v680 = vpack.c.b16 %v600, %v592
    %v681 = vpack.c.b16 %v601, %v593
    %v682 = vpack.c.b16 %v610, %v602
    %v683 = vpack.c.b16 %v611, %v603
    %v684 = vpack.c.b16 %v612, %v604
    %v685 = vpack.c.b16 %v613, %v605
    %v686 = vpack.c.b16 %v614, %v606
    %v687 = vpack.c.b16 %v615, %v607
    %v688 = vpack.c.b16 %v616, %v608
    %v689 = vpack.c.b16 %v617, %v609
    %v690 = vpack.c.b16 %v626, %v618
    %v691 = vpack.c.b16 %v627, %v619
    %v692 = vpack.c.b16 %v628, %v620
    %v693 = vpack.c.b16 %v629, %v621
    %v694 = vpack.c.b16 %v630, %v622
    %v695 = vpack.c.b16 %v631, %v623
    %v696 = vpack.c.b16 %v632, %v624
    %v697 = vpack.c.b16 %v633, %v625
    %v698 = vpack.c.b16 %v642, %v634
    %v699 = vpack.c.b16 %v643, %v635
    %v700 = vpack.c.b16 %v644, %v636
    %v701 = vpack.c.b16 %v645, %v637
    %v702 = vpack.c.b16 %v646, %v638
    %v703 = vpack.c.b16 %v647, %v639
    %v704 = vpack.c.b16 %v648, %v640
    %v705 = vpack.c.b16 %v649, %v641
    %v706 = vpack.c.b16 %v658, %v650
    %v707 = vpack.c.b16 %v659, %v651
    %v708 = vpack.c.b16 %v660, %v652
    %v709 = vpack.c.b16 %v661, %v653
    %v710 = vpack.c.b16 %v662, %v654
    %v711 = vpack.c.b16 %v663, %v655
    %v712 = vpack.c.b16 %v664, %v656
    %v713 = vpack.c.b16 %v665, %v657
    %v714 = vpack.c.b16 %v666, %v666
    %v715 = vpack.c.b16 %v667, %v667
    %v716 = vpack.c.b16 %v668, %v668
    %v717 = vpack.c.b16 %v669, %v669
    %v718 = vpack.c.b16 %v670, %v670
    %v719 = vpack.c.b16 %v671, %v671
    %v720 = vpack.c.b16 %v672, %v672
    %v721 = vpack.c.b16 %v673, %v673
    %v763 = vsel %vm300, %v714, 0
    %v766 = vsel %vm300, %v715, 0
    %v769 = vsel %vm300, %v716, 0
    %v772 = vsel %vm300, %v717, 0
    %v775 = vsel %vm300, %v718, 0
    %v778 = vsel %vm300, %v719, 0
    %v781 = vsel %vm300, %v720, 0
    %v784 = vsel %vm300, %v721, 0
    %786 = vmatprep.subr.bf16.mxu0 %v675
    %787 = vmatpush1.bf16.msra.mxu0 %v674
    %788 = vmatprep.subr.bf16.mxu0 %v683
    %789 = vmatpush1.bf16.msra.mxu0 %v682
    %790 = vmatprep.subr.bf16.mxu0 %v691
    %791 = vmatpush1.bf16.msra.mxu0 %v690
    %792 = vmatprep.subr.bf16.mxu0 %v699
    %793 = vmatpush1.bf16.msra.mxu0 %v698
    %794 = vmatprep.subr.bf16.mxu0 %v707
    %795 = vmatpush1.bf16.msra.mxu0 %v706
    %796 = vmatprep.subr.bf16.mxu0 %v766
    %797 = vmatpush1.bf16.msra.mxu0 %v763
    %798 = vmatprep.subr.bf16.mxu0 0
    %799 = vmatpush1.bf16.msra.mxu0 0
    %800 = vmatprep.subr.bf16.mxu0 0
    %801 = vmatpush1.bf16.msra.mxu0 0
    %802 = vmatprep.subr.bf16.mxu0 0
    %803 = vmatpush1.bf16.msra.mxu0 0
    %804 = vmatprep.subr.bf16.mxu0 0
    %805 = vmatpush1.bf16.msra.mxu0 0
    %806 = vmatprep.subr.bf16.mxu0 0
    %807 = vmatpush1.bf16.msra.mxu0 0
    %808 = vmatprep.subr.bf16.mxu0 0
    %809 = vmatpush1.bf16.msra.mxu0 0
    %810 = vmatprep.subr.bf16.mxu0 0
    %811 = vmatpush1.bf16.msra.mxu0 0
    %812 = vmatprep.subr.bf16.mxu0 0
    %813 = vmatpush1.bf16.msra.mxu0 0
    %814 = vmatprep.subr.bf16.mxu0 0
    %815 = vmatpush1.bf16.msra.mxu0 0
    %816 = vmatprep.subr.bf16.mxu0 0
    %817 = vmatpush1.bf16.msra.mxu0 0
    %818 = vmatprep.mubr.bf16.mxu0 0
    %819 = vmatmul.mubr.bf16.gmra.mrb[0].mxu0 %v298
    %v820 = vpop.f32.mrb[0].mxu0
    %v821 = vadd.f32 0.0, %v820
    %v822 = vpop.f32.mrb[0].mxu0
    %v823 = vadd.f32 0.0, %v822
    %v824 = vpop.f32.mrb[0].mxu0
    %v825 = vadd.f32 0.0, %v824
    %v826 = vpop.f32.mrb[0].mxu0
    %v827 = vadd.f32 0.0, %v826
    %828 = vdwg.mxu0
    %829 = vmatprep.subr.bf16.mxu0 %v677
    %830 = vmatpush1.bf16.msra.mxu0 %v676
    %831 = vmatprep.subr.bf16.mxu0 %v685
    %832 = vmatpush1.bf16.msra.mxu0 %v684
    %833 = vmatprep.subr.bf16.mxu0 %v693
    %834 = vmatpush1.bf16.msra.mxu0 %v692
    %835 = vmatprep.subr.bf16.mxu0 %v701
    %836 = vmatpush1.bf16.msra.mxu0 %v700
    %837 = vmatprep.subr.bf16.mxu0 %v709
    %838 = vmatpush1.bf16.msra.mxu0 %v708
    %839 = vmatprep.subr.bf16.mxu0 %v772
    %840 = vmatpush1.bf16.msra.mxu0 %v769
    %841 = vmatprep.subr.bf16.mxu0 0
    %842 = vmatpush1.bf16.msra.mxu0 0
    %843 = vmatprep.subr.bf16.mxu0 0
    %844 = vmatpush1.bf16.msra.mxu0 0
    %845 = vmatprep.subr.bf16.mxu0 0
    %846 = vmatpush1.bf16.msra.mxu0 0
    %847 = vmatprep.subr.bf16.mxu0 0
    %848 = vmatpush1.bf16.msra.mxu0 0
    %849 = vmatprep.subr.bf16.mxu0 0
    %850 = vmatpush1.bf16.msra.mxu0 0
    %851 = vmatprep.subr.bf16.mxu0 0
    %852 = vmatpush1.bf16.msra.mxu0 0
    %853 = vmatprep.subr.bf16.mxu0 0
    %854 = vmatpush1.bf16.msra.mxu0 0
    %855 = vmatprep.subr.bf16.mxu0 0
    %856 = vmatpush1.bf16.msra.mxu0 0
    %857 = vmatprep.subr.bf16.mxu0 0
    %858 = vmatpush1.bf16.msra.mxu0 0
    %859 = vmatprep.subr.bf16.mxu0 0
    %860 = vmatpush1.bf16.msra.mxu0 0
    %861 = vmatprep.mubr.bf16.mxu0 0
    %862 = vmatmul.mubr.bf16.gmra.mrb[0].mxu0 %v298
    %v863 = vpop.f32.mrb[0].mxu0
    %v864 = vadd.f32 0.0, %v863
    %v865 = vpop.f32.mrb[0].mxu0
    %v866 = vadd.f32 0.0, %v865
    %v867 = vpop.f32.mrb[0].mxu0
    %v868 = vadd.f32 0.0, %v867
    %v869 = vpop.f32.mrb[0].mxu0
    %v870 = vadd.f32 0.0, %v869
    %871 = vdwg.mxu0
    %872 = vmatprep.subr.bf16.mxu0 %v679
    %873 = vmatpush1.bf16.msra.mxu0 %v678
    %874 = vmatprep.subr.bf16.mxu0 %v687
    %875 = vmatpush1.bf16.msra.mxu0 %v686
    %876 = vmatprep.subr.bf16.mxu0 %v695
    %877 = vmatpush1.bf16.msra.mxu0 %v694
    %878 = vmatprep.subr.bf16.mxu0 %v703
    %879 = vmatpush1.bf16.msra.mxu0 %v702
    %880 = vmatprep.subr.bf16.mxu0 %v711
    %881 = vmatpush1.bf16.msra.mxu0 %v710
    %882 = vmatprep.subr.bf16.mxu0 %v778
    %883 = vmatpush1.bf16.msra.mxu0 %v775
    %884 = vmatprep.subr.bf16.mxu0 0
    %885 = vmatpush1.bf16.msra.mxu0 0
    %886 = vmatprep.subr.bf16.mxu0 0
    %887 = vmatpush1.bf16.msra.mxu0 0
    %888 = vmatprep.subr.bf16.mxu0 0
    %889 = vmatpush1.bf16.msra.mxu0 0
    %890 = vmatprep.subr.bf16.mxu0 0
    %891 = vmatpush1.bf16.msra.mxu0 0
    %892 = vmatprep.subr.bf16.mxu0 0
    %893 = vmatpush1.bf16.msra.mxu0 0
    %894 = vmatprep.subr.bf16.mxu0 0
    %895 = vmatpush1.bf16.msra.mxu0 0
    %896 = vmatprep.subr.bf16.mxu0 0
    %897 = vmatpush1.bf16.msra.mxu0 0
    %898 = vmatprep.subr.bf16.mxu0 0
    %899 = vmatpush1.bf16.msra.mxu0 0
    %900 = vmatprep.subr.bf16.mxu0 0
    %901 = vmatpush1.bf16.msra.mxu0 0
    %902 = vmatprep.subr.bf16.mxu0 0
    %903 = vmatpush1.bf16.msra.mxu0 0
    %904 = vmatprep.mubr.bf16.mxu0 0
    %905 = vmatmul.mubr.bf16.gmra.mrb[0].mxu0 %v298
    %v906 = vpop.f32.mrb[0].mxu0
    %v907 = vadd.f32 0.0, %v906
    %v908 = vpop.f32.mrb[0].mxu0
    %v909 = vadd.f32 0.0, %v908
    %v910 = vpop.f32.mrb[0].mxu0
    %v911 = vadd.f32 0.0, %v910
    %v912 = vpop.f32.mrb[0].mxu0
    %v913 = vadd.f32 0.0, %v912
    %914 = vdwg.mxu0
    %915 = vmatprep.subr.bf16.mxu0 %v681
    %916 = vmatpush1.bf16.msra.mxu0 %v680
    %917 = vmatprep.subr.bf16.mxu0 %v689
    %918 = vmatpush1.bf16.msra.mxu0 %v688
    %919 = vmatprep.subr.bf16.mxu0 %v697
    %920 = vmatpush1.bf16.msra.mxu0 %v696
    %921 = vmatprep.subr.bf16.mxu0 %v705
    %922 = vmatpush1.bf16.msra.mxu0 %v704
    %923 = vmatprep.subr.bf16.mxu0 %v713
    %924 = vmatpush1.bf16.msra.mxu0 %v712
    %925 = vmatprep.subr.bf16.mxu0 %v784
    %926 = vmatpush1.bf16.msra.mxu0 %v781
    %927 = vmatprep.subr.bf16.mxu0 0
    %928 = vmatpush1.bf16.msra.mxu0 0
    %929 = vmatprep.subr.bf16.mxu0 0
    %930 = vmatpush1.bf16.msra.mxu0 0
    %931 = vmatprep.subr.bf16.mxu0 0
    %932 = vmatpush1.bf16.msra.mxu0 0
    %933 = vmatprep.subr.bf16.mxu0 0
    %934 = vmatpush1.bf16.msra.mxu0 0
    %935 = vmatprep.subr.bf16.mxu0 0
    %936 = vmatpush1.bf16.msra.mxu0 0
    %937 = vmatprep.subr.bf16.mxu0 0
    %938 = vmatpush1.bf16.msra.mxu0 0
    %939 = vmatprep.subr.bf16.mxu0 0
    %940 = vmatpush1.bf16.msra.mxu0 0
    %941 = vmatprep.subr.bf16.mxu0 0
    %942 = vmatpush1.bf16.msra.mxu0 0
    %943 = vmatprep.subr.bf16.mxu0 0
    %944 = vmatpush1.bf16.msra.mxu0 0
    %945 = vmatprep.subr.bf16.mxu0 0
    %946 = vmatpush1.bf16.msra.mxu0 0
    %947 = vmatprep.mubr.bf16.mxu0 0
    %948 = vmatmul.mubr.bf16.gmra.mrb[0].mxu0 %v298
    %v949 = vpop.f32.mrb[0].mxu0
    %v950 = vadd.f32 0.0, %v949
    %v951 = vpop.f32.mrb[0].mxu0
    %v952 = vadd.f32 0.0, %v951
    %v953 = vpop.f32.mrb[0].mxu0
    %v954 = vadd.f32 0.0, %v953
    %v955 = vpop.f32.mrb[0].mxu0
    %v956 = vadd.f32 0.0, %v955
    %957 = vdwg.mxu0
    %v958 = vadd.f32 %v360, %v362
    %v959 = vadd.f32 %v958, %v403
    %v960 = vadd.f32 %v959, %v405
    %v961 = vadd.f32 %v960, %v446
    %v962 = vadd.f32 %v961, %v448
    %v963 = vadd.f32 %v962, %v489
    %vm964 = vcmask 850944
    %v965 = vsel %vm964, %v491, 0.0
    %v966 = vadd.f32 %v963, %v965
    %967 = vadd.xlane.f32.xlu0 %v966
    %v968 = vpop.xlane.xlu0 %967
    %v969 = vsel %vm300, %v364, 0.0
    %v970 = vsel %vm300, %v366, 0.0
    %v971 = vadd.f32 %v969, %v970
    %v972 = vsel %vm300, %v407, 0.0
    %v973 = vadd.f32 %v971, %v972
    %v974 = vsel %vm300, %v409, 0.0
    %v975 = vadd.f32 %v973, %v974
    %v976 = vsel %vm300, %v450, 0.0
    %v977 = vadd.f32 %v975, %v976
    %v978 = vsel %vm300, %v452, 0.0
    %v979 = vadd.f32 %v977, %v978
    %v980 = vsel %vm300, %v493, 0.0
    %v981 = vadd.f32 %v979, %v980
    %vm982 = vcmask 844800
    %v983 = vsel %vm982, %v495, 0.0
    %v984 = vadd.f32 %v981, %v983
    %985 = vadd.xlane.f32.xlu0 %v984
    %v986 = vpop.xlane.xlu0 %985
    %v987 = vadd.f32 %v968, 0.0
    %v988 = vadd.f32 %v986, 0.0
    %v989 = vmul.f32 %v360, %v360
    %v990 = vmul.f32 %v362, %v362
    %v991 = vmul.f32 %v403, %v403
    %v992 = vmul.f32 %v405, %v405
    %v993 = vmul.f32 %v446, %v446
    %v994 = vmul.f32 %v448, %v448
    %v995 = vmul.f32 %v489, %v489
    %v996 = vmul.f32 %v491, %v491
    %v997 = vmul.f32 %v364, %v364
    %v998 = vmul.f32 %v366, %v366
    %v999 = vmul.f32 %v407, %v407
    %v1000 = vmul.f32 %v409, %v409
    %v1001 = vmul.f32 %v450, %v450
    %v1002 = vmul.f32 %v452, %v452
    %v1003 = vmul.f32 %v493, %v493
    %v1004 = vmul.f32 %v495, %v495
    %v1005 = vadd.f32 %v989, %v990
    %v1006 = vadd.f32 %v1005, %v991
    %v1007 = vadd.f32 %v1006, %v992
    %v1008 = vadd.f32 %v1007, %v993
    %v1009 = vadd.f32 %v1008, %v994
    %v1010 = vadd.f32 %v1009, %v995
    %v1011 = vsel %vm964, %v996, 0.0
    %v1012 = vadd.f32 %v1010, %v1011
    %1013 = vadd.xlane.f32.xlu0 %v1012
    %v1014 = vpop.xlane.xlu0 %1013
    %v1015 = vsel %vm300, %v997, 0.0
    %v1016 = vsel %vm300, %v998, 0.0
    %v1017 = vadd.f32 %v1015, %v1016
    %v1018 = vsel %vm300, %v999, 0.0
    %v1019 = vadd.f32 %v1017, %v1018
    %v1020 = vsel %vm300, %v1000, 0.0
    %v1021 = vadd.f32 %v1019, %v1020
    %v1022 = vsel %vm300, %v1001, 0.0
    %v1023 = vadd.f32 %v1021, %v1022
    %v1024 = vsel %vm300, %v1002, 0.0
    %v1025 = vadd.f32 %v1023, %v1024
    %v1026 = vsel %vm300, %v1003, 0.0
    %v1027 = vadd.f32 %v1025, %v1026
    %v1028 = vsel %vm982, %v1004, 0.0
    %v1029 = vadd.f32 %v1027, %v1028
    %1030 = vadd.xlane.f32.xlu0 %v1029
    %v1031 = vpop.xlane.xlu0 %1030
    %v1032 = vadd.f32 %v1014, 0.0
    %v1033 = vadd.f32 %v1031, 0.0
    %v1034 = vadd.f32 %v821, %v823
    %v1035 = vadd.f32 %v1034, %v864
    %v1036 = vadd.f32 %v1035, %v866
    %v1037 = vadd.f32 %v1036, %v907
    %v1038 = vadd.f32 %v1037, %v909
    %v1039 = vadd.f32 %v1038, %v950
    %v1040 = vsel %vm964, %v952, 0.0
    %v1041 = vadd.f32 %v1039, %v1040
    %1042 = vadd.xlane.f32.xlu0 %v1041
    %v1043 = vpop.xlane.xlu0 %1042
    %v1044 = vsel %vm300, %v825, 0.0
    %v1045 = vsel %vm300, %v827, 0.0
    %v1046 = vadd.f32 %v1044, %v1045
    %v1047 = vsel %vm300, %v868, 0.0
    %v1048 = vadd.f32 %v1046, %v1047
    %v1049 = vsel %vm300, %v870, 0.0
    %v1050 = vadd.f32 %v1048, %v1049
    %v1051 = vsel %vm300, %v911, 0.0
    %v1052 = vadd.f32 %v1050, %v1051
    %v1053 = vsel %vm300, %v913, 0.0
    %v1054 = vadd.f32 %v1052, %v1053
    %v1055 = vsel %vm300, %v954, 0.0
    %v1056 = vadd.f32 %v1054, %v1055
    %v1057 = vsel %vm982, %v956, 0.0
    %v1058 = vadd.f32 %v1056, %v1057
    %1059 = vadd.xlane.f32.xlu0 %v1058
    %v1060 = vpop.xlane.xlu0 %1059
    %v1061 = vadd.f32 %v987, %v1043
    %v1062 = vadd.f32 %v988, %v1060
    %v1063 = vmul.f32 %v821, %v821
    %v1064 = vmul.f32 %v823, %v823
    %v1065 = vmul.f32 %v864, %v864
    %v1066 = vmul.f32 %v866, %v866
    %v1067 = vmul.f32 %v907, %v907
    %v1068 = vmul.f32 %v909, %v909
    %v1069 = vmul.f32 %v950, %v950
    %v1070 = vmul.f32 %v952, %v952
    %v1071 = vmul.f32 %v825, %v825
    %v1072 = vmul.f32 %v827, %v827
    %v1073 = vmul.f32 %v868, %v868
    %v1074 = vmul.f32 %v870, %v870
    %v1075 = vmul.f32 %v911, %v911
    %v1076 = vmul.f32 %v913, %v913
    %v1077 = vmul.f32 %v954, %v954
    %v1078 = vmul.f32 %v956, %v956
    %v1079 = vadd.f32 %v1063, %v1064
    %v1080 = vadd.f32 %v1079, %v1065
    %v1081 = vadd.f32 %v1080, %v1066
    %v1082 = vadd.f32 %v1081, %v1067
    %v1083 = vadd.f32 %v1082, %v1068
    %v1084 = vadd.f32 %v1083, %v1069
    %v1085 = vsel %vm964, %v1070, 0.0
    %v1086 = vadd.f32 %v1084, %v1085
    %1087 = vadd.xlane.f32.xlu0 %v1086
    %v1088 = vpop.xlane.xlu0 %1087
    %v1089 = vsel %vm300, %v1071, 0.0
    %v1090 = vsel %vm300, %v1072, 0.0
    %v1091 = vadd.f32 %v1089, %v1090
    %v1092 = vsel %vm300, %v1073, 0.0
    %v1093 = vadd.f32 %v1091, %v1092
    %v1094 = vsel %vm300, %v1074, 0.0
    %v1095 = vadd.f32 %v1093, %v1094
    %v1096 = vsel %vm300, %v1075, 0.0
    %v1097 = vadd.f32 %v1095, %v1096
    %v1098 = vsel %vm300, %v1076, 0.0
    %v1099 = vadd.f32 %v1097, %v1098
    %v1100 = vsel %vm300, %v1077, 0.0
    %v1101 = vadd.f32 %v1099, %v1100
    %v1102 = vsel %vm982, %v1078, 0.0
    %v1103 = vadd.f32 %v1101, %v1102
    %1104 = vadd.xlane.f32.xlu0 %v1103
    %v1105 = vpop.xlane.xlu0 %1104
    %v1106 = vadd.f32 %v1032, %v1088
    %v1107 = vadd.f32 %v1033, %v1105
    %v1108 = vmul.f32 %v1061, 0.0005
    %v1109 = vmul.f32 %v1062, 0.0005
    %v1110 = vmul.f32 %v1106, 0.0005
    %v1111 = vmul.f32 %v1107, 0.0005
    %v1112 = vmul.f32 %v1108, %v1108
    %v1113 = vmul.f32 %v1109, %v1109
    %v1114 = vsub.f32 %v1110, %v1112
    %v1115 = vsub.f32 %v1111, %v1113
    %v1116 = vadd.f32 %v1114, 1e-05
    %v1117 = vadd.f32 %v1115, 1e-05
    %v1118 = vrsqrt.pop %v1116
    %v1119 = vrsqrt.pop %v1117
    %v1120 = vld [vmem:[%s2] sm:$0xff]
    %v1121 = vld [vmem:[%s2 + $0x8] sm:$0x3]
    %v1122 = vmul.f32 %v1118, %v1120
    %v1123 = vmul.f32 %v1119, %v1121
    %s1124 = scalar_lea.vmem %s2, 16
    %v1125 = vld [vmem:[%s1124] sm:$0xff]
    %v1126 = vld [vmem:[%s1124 + $0x8] sm:$0x3]
    %v1127 = vmul.f32 %v1108, %v1122
    %v1128 = vmul.f32 %v1109, %v1123
    %v1129 = vsub.f32 %v1125, %v1127
    %v1130 = vsub.f32 %v1126, %v1128
    %1132 = vset.pattern.permute.xlu0 0
    %1133 = vperm.xlu0 %1132, %v1122
    %v1134 = vpop.permute.xlu0 %1133
    %1137 = vset.pattern.permute.xlu0 0
    %1138 = vperm.xlu0 %1137, %v1123
    %v1139 = vpop.permute.xlu0 %1138
    %v1141 = vmul.f32 %v360, %v1134
    %v1142 = vmul.f32 %v362, %v1134
    %v1143 = vmul.f32 %v403, %v1134
    %v1144 = vmul.f32 %v405, %v1134
    %v1145 = vmul.f32 %v446, %v1134
    %v1146 = vmul.f32 %v448, %v1134
    %v1147 = vmul.f32 %v489, %v1134
    %v1148 = vmul.f32 %v491, %v1134
    %v1149 = vmul.f32 %v364, %v1139
    %v1150 = vmul.f32 %v366, %v1139
    %v1151 = vmul.f32 %v407, %v1139
    %v1152 = vmul.f32 %v409, %v1139
    %v1153 = vmul.f32 %v450, %v1139
    %v1154 = vmul.f32 %v452, %v1139
    %v1155 = vmul.f32 %v493, %v1139
    %v1156 = vmul.f32 %v495, %v1139
    %1158 = vset.pattern.permute.xlu0 0
    %1159 = vperm.xlu0 %1158, %v1129
    %v1160 = vpop.permute.xlu0 %1159
    %1163 = vset.pattern.permute.xlu0 0
    %1164 = vperm.xlu0 %1163, %v1130
    %v1165 = vpop.permute.xlu0 %1164
    %v1167 = vadd.f32 %v1141, %v1160
    %v1168 = vadd.f32 %v1142, %v1160
    %v1169 = vadd.f32 %v1143, %v1160
    %v1170 = vadd.f32 %v1144, %v1160
    %v1171 = vadd.f32 %v1145, %v1160
    %v1172 = vadd.f32 %v1146, %v1160
    %v1173 = vadd.f32 %v1147, %v1160
    %v1174 = vadd.f32 %v1148, %v1160
    %v1175 = vadd.f32 %v1149, %v1165
    %v1176 = vadd.f32 %v1150, %v1165
    %v1177 = vadd.f32 %v1151, %v1165
    %v1178 = vadd.f32 %v1152, %v1165
    %v1179 = vadd.f32 %v1153, %v1165
    %v1180 = vadd.f32 %v1154, %v1165
    %v1181 = vadd.f32 %v1155, %v1165
    %v1182 = vadd.f32 %v1156, %v1165
    %v1183 = vmax.f32 %v1167, 0.0
    %v1184 = vmax.f32 %v1168, 0.0
    %v1185 = vmax.f32 %v1169, 0.0
    %v1186 = vmax.f32 %v1170, 0.0
    %v1187 = vmax.f32 %v1171, 0.0
    %v1188 = vmax.f32 %v1172, 0.0
    %v1189 = vmax.f32 %v1173, 0.0
    %v1190 = vmax.f32 %v1174, 0.0
    %v1191 = vmax.f32 %v1175, 0.0
    %v1192 = vmax.f32 %v1176, 0.0
    %v1193 = vmax.f32 %v1177, 0.0
    %v1194 = vmax.f32 %v1178, 0.0
    %v1195 = vmax.f32 %v1179, 0.0
    %v1196 = vmax.f32 %v1180, 0.0
    %v1197 = vmax.f32 %v1181, 0.0
    %v1198 = vmax.f32 %v1182, 0.0
    %v1199 = vmul.f32 %v821, %v1134
    %v1200 = vmul.f32 %v823, %v1134
    %v1201 = vmul.f32 %v864, %v1134
    %v1202 = vmul.f32 %v866, %v1134
    %v1203 = vmul.f32 %v907, %v1134
    %v1204 = vmul.f32 %v909, %v1134
    %v1205 = vmul.f32 %v950, %v1134
    %v1206 = vmul.f32 %v952, %v1134
    %v1207 = vmul.f32 %v825, %v1139
    %v1208 = vmul.f32 %v827, %v1139
    %v1209 = vmul.f32 %v868, %v1139
    %v1210 = vmul.f32 %v870, %v1139
    %v1211 = vmul.f32 %v911, %v1139
    %v1212 = vmul.f32 %v913, %v1139
    %v1213 = vmul.f32 %v954, %v1139
    %v1214 = vmul.f32 %v956, %v1139
    %v1215 = vadd.f32 %v1199, %v1160
    %v1216 = vadd.f32 %v1200, %v1160
    %v1217 = vadd.f32 %v1201, %v1160
    %v1218 = vadd.f32 %v1202, %v1160
    %v1219 = vadd.f32 %v1203, %v1160
    %v1220 = vadd.f32 %v1204, %v1160
    %v1221 = vadd.f32 %v1205, %v1160
    %v1222 = vadd.f32 %v1206, %v1160
    %v1223 = vadd.f32 %v1207, %v1165
    %v1224 = vadd.f32 %v1208, %v1165
    %v1225 = vadd.f32 %v1209, %v1165
    %v1226 = vadd.f32 %v1210, %v1165
    %v1227 = vadd.f32 %v1211, %v1165
    %v1228 = vadd.f32 %v1212, %v1165
    %v1229 = vadd.f32 %v1213, %v1165
    %v1230 = vadd.f32 %v1214, %v1165
    %v1231 = vmax.f32 %v1215, 0.0
    %v1232 = vmax.f32 %v1216, 0.0
    %v1233 = vmax.f32 %v1217, 0.0
    %v1234 = vmax.f32 %v1218, 0.0
    %v1235 = vmax.f32 %v1219, 0.0
    %v1236 = vmax.f32 %v1220, 0.0
    %v1237 = vmax.f32 %v1221, 0.0
    %v1238 = vmax.f32 %v1222, 0.0
    %v1239 = vmax.f32 %v1223, 0.0
    %v1240 = vmax.f32 %v1224, 0.0
    %v1241 = vmax.f32 %v1225, 0.0
    %v1242 = vmax.f32 %v1226, 0.0
    %v1243 = vmax.f32 %v1227, 0.0
    %v1244 = vmax.f32 %v1228, 0.0
    %v1245 = vmax.f32 %v1229, 0.0
    %v1246 = vmax.f32 %v1230, 0.0
    %v1247 = vlaneseq
    %v1248 = vand.u32 %v1247, 127
    %v1249 = vld [vmem:[%s3] sm:$0xff]
    %v1250 = vld [vmem:[%s3 + $0x8] sm:$0xff]
    %v1251 = vld [vmem:[%s3 + $0x10] sm:$0xff]
    %v1252 = vld [vmem:[%s3 + $0x18] sm:$0xff]
    %v1253 = vld [vmem:[%s3 + $0x20] sm:$0xff]
    %v1254 = vld [vmem:[%s3 + $0x28] sm:$0xff]
    %v1255 = vld [vmem:[%s3 + $0x30] sm:$0xff]
    %v1256 = vld [vmem:[%s3 + $0x38] sm:$0xff]
    %v1257 = vld [vmem:[%s3 + $0x40] sm:$0x3]
    %v1258 = vld [vmem:[%s3 + $0x48] sm:$0x3]
    %v1259 = vld [vmem:[%s3 + $0x50] sm:$0x3]
    %v1260 = vld [vmem:[%s3 + $0x58] sm:$0x3]
    %v1261 = vld [vmem:[%s3 + $0x60] sm:$0x3]
    %v1262 = vld [vmem:[%s3 + $0x68] sm:$0x3]
    %v1263 = vld [vmem:[%s3 + $0x70] sm:$0x3]
    %v1264 = vld [vmem:[%s3 + $0x78] sm:$0x3]
    %vm1265 = vcmp.eq.s32.totalorder %v1248, 0
    %v1266 = vmul.f32 %v1183, %v1249
    %v1267 = vmul.f32 %v1184, %v1250
    %v1268 = vmul.f32 %v1185, %v1251
    %v1269 = vmul.f32 %v1186, %v1252
    %v1270 = vmul.f32 %v1187, %v1253
    %v1271 = vmul.f32 %v1188, %v1254
    %v1272 = vmul.f32 %v1189, %v1255
    %v1273 = vmul.f32 %v1190, %v1256
    %v1274 = vmul.f32 %v1191, %v1257
    %v1275 = vmul.f32 %v1192, %v1258
    %v1276 = vmul.f32 %v1193, %v1259
    %v1277 = vmul.f32 %v1194, %v1260
    %v1278 = vmul.f32 %v1195, %v1261
    %v1279 = vmul.f32 %v1196, %v1262
    %v1280 = vmul.f32 %v1197, %v1263
    %v1281 = vmul.f32 %v1198, %v1264
    %v1282 = vadd.f32 %v1266, %v1267
    %v1283 = vadd.f32 %v1282, %v1268
    %v1284 = vadd.f32 %v1283, %v1269
    %v1285 = vadd.f32 %v1284, %v1270
    %v1286 = vadd.f32 %v1285, %v1271
    %v1287 = vadd.f32 %v1286, %v1272
    %v1288 = vsel %vm964, %v1273, 0.0
    %v1289 = vadd.f32 %v1287, %v1288
    %1290 = vadd.xlane.f32.xlu0 %v1289
    %v1291 = vpop.xlane.xlu0 %1290
    %v1292 = vsel %vm300, %v1274, 0.0
    %v1293 = vsel %vm300, %v1275, 0.0
    %v1294 = vadd.f32 %v1292, %v1293
    %v1295 = vsel %vm300, %v1276, 0.0
    %v1296 = vadd.f32 %v1294, %v1295
    %v1297 = vsel %vm300, %v1277, 0.0
    %v1298 = vadd.f32 %v1296, %v1297
    %v1299 = vsel %vm300, %v1278, 0.0
    %v1300 = vadd.f32 %v1298, %v1299
    %v1301 = vsel %vm300, %v1279, 0.0
    %v1302 = vadd.f32 %v1300, %v1301
    %v1303 = vsel %vm300, %v1280, 0.0
    %v1304 = vadd.f32 %v1302, %v1303
    %v1305 = vsel %vm982, %v1281, 0.0
    %v1306 = vadd.f32 %v1304, %v1305
    %1307 = vadd.xlane.f32.xlu0 %v1306
    %v1308 = vpop.xlane.xlu0 %1307
    %v1309 = vsel %vm300, %v1308, 0.0
    %v1310 = vadd.f32 %v1291, %v1309
    %v1311 = vrot.slane %v1310, 4
    %v1312 = vadd.f32 %v1310, %v1311
    %v1313 = vrot.slane %v1312, 2
    %v1314 = vadd.f32 %v1312, %v1313
    %v1315 = vrot.slane %v1314, 1
    %v1316 = vadd.f32 %v1314, %v1315
    %v1317 = vsel %vm1265, %v1316, 0.0
    %v1318 = vadd.f32 %v1317, 0.0
    %v1319 = vmul.f32 %v1231, %v1249
    %v1320 = vmul.f32 %v1232, %v1250
    %v1321 = vmul.f32 %v1233, %v1251
    %v1322 = vmul.f32 %v1234, %v1252
    %v1323 = vmul.f32 %v1235, %v1253
    %v1324 = vmul.f32 %v1236, %v1254
    %v1325 = vmul.f32 %v1237, %v1255
    %v1326 = vmul.f32 %v1238, %v1256
    %v1327 = vmul.f32 %v1239, %v1257
    %v1328 = vmul.f32 %v1240, %v1258
    %v1329 = vmul.f32 %v1241, %v1259
    %v1330 = vmul.f32 %v1242, %v1260
    %v1331 = vmul.f32 %v1243, %v1261
    %v1332 = vmul.f32 %v1244, %v1262
    %v1333 = vmul.f32 %v1245, %v1263
    %v1334 = vmul.f32 %v1246, %v1264
    %v1335 = vadd.f32 %v1319, %v1320
    %v1336 = vadd.f32 %v1335, %v1321
    %v1337 = vadd.f32 %v1336, %v1322
    %v1338 = vadd.f32 %v1337, %v1323
    %v1339 = vadd.f32 %v1338, %v1324
    %v1340 = vadd.f32 %v1339, %v1325
    %v1341 = vsel %vm964, %v1326, 0.0
    %v1342 = vadd.f32 %v1340, %v1341
    %1343 = vadd.xlane.f32.xlu0 %v1342
    %v1344 = vpop.xlane.xlu0 %1343
    %v1345 = vsel %vm300, %v1327, 0.0
    %v1346 = vsel %vm300, %v1328, 0.0
    %v1347 = vadd.f32 %v1345, %v1346
    %v1348 = vsel %vm300, %v1329, 0.0
    %v1349 = vadd.f32 %v1347, %v1348
    %v1350 = vsel %vm300, %v1330, 0.0
    %v1351 = vadd.f32 %v1349, %v1350
    %v1352 = vsel %vm300, %v1331, 0.0
    %v1353 = vadd.f32 %v1351, %v1352
    %v1354 = vsel %vm300, %v1332, 0.0
    %v1355 = vadd.f32 %v1353, %v1354
    %v1356 = vsel %vm300, %v1333, 0.0
    %v1357 = vadd.f32 %v1355, %v1356
    %v1358 = vsel %vm982, %v1334, 0.0
    %v1359 = vadd.f32 %v1357, %v1358
    %1360 = vadd.xlane.f32.xlu0 %v1359
    %v1361 = vpop.xlane.xlu0 %1360
    %v1362 = vsel %vm300, %v1361, 0.0
    %v1363 = vadd.f32 %v1344, %v1362
    %v1364 = vrot.slane %v1363, 4
    %v1365 = vadd.f32 %v1363, %v1364
    %v1366 = vrot.slane %v1365, 2
    %v1367 = vadd.f32 %v1365, %v1366
    %v1368 = vrot.slane %v1367, 1
    %v1369 = vadd.f32 %v1367, %v1368
    %v1370 = vsel %vm1265, %v1369, 0.0
    %v1371 = vadd.f32 %v1370, 0.0
    %s1372 = scalar_lea.vmem %s3, 128
    %v1373 = vld [vmem:[%s1372] sm:$0xff]
    %v1374 = vld [vmem:[%s1372 + $0x8] sm:$0xff]
    %v1375 = vld [vmem:[%s1372 + $0x10] sm:$0xff]
    %v1376 = vld [vmem:[%s1372 + $0x18] sm:$0xff]
    %v1377 = vld [vmem:[%s1372 + $0x20] sm:$0xff]
    %v1378 = vld [vmem:[%s1372 + $0x28] sm:$0xff]
    %v1379 = vld [vmem:[%s1372 + $0x30] sm:$0xff]
    %v1380 = vld [vmem:[%s1372 + $0x38] sm:$0xff]
    %v1381 = vld [vmem:[%s1372 + $0x40] sm:$0x3]
    %v1382 = vld [vmem:[%s1372 + $0x48] sm:$0x3]
    %v1383 = vld [vmem:[%s1372 + $0x50] sm:$0x3]
    %v1384 = vld [vmem:[%s1372 + $0x58] sm:$0x3]
    %v1385 = vld [vmem:[%s1372 + $0x60] sm:$0x3]
    %v1386 = vld [vmem:[%s1372 + $0x68] sm:$0x3]
    %v1387 = vld [vmem:[%s1372 + $0x70] sm:$0x3]
    %v1388 = vld [vmem:[%s1372 + $0x78] sm:$0x3]
    %vm1389 = vcmp.eq.s32.totalorder %v1248, 1
    %v1390 = vmul.f32 %v1183, %v1373
    %v1391 = vmul.f32 %v1184, %v1374
    %v1392 = vmul.f32 %v1185, %v1375
    %v1393 = vmul.f32 %v1186, %v1376
    %v1394 = vmul.f32 %v1187, %v1377
    %v1395 = vmul.f32 %v1188, %v1378
    %v1396 = vmul.f32 %v1189, %v1379
    %v1397 = vmul.f32 %v1190, %v1380
    %v1398 = vmul.f32 %v1191, %v1381
    %v1399 = vmul.f32 %v1192, %v1382
    %v1400 = vmul.f32 %v1193, %v1383
    %v1401 = vmul.f32 %v1194, %v1384
    %v1402 = vmul.f32 %v1195, %v1385
    %v1403 = vmul.f32 %v1196, %v1386
    %v1404 = vmul.f32 %v1197, %v1387
    %v1405 = vmul.f32 %v1198, %v1388
    %v1406 = vadd.f32 %v1390, %v1391
    %v1407 = vadd.f32 %v1406, %v1392
    %v1408 = vadd.f32 %v1407, %v1393
    %v1409 = vadd.f32 %v1408, %v1394
    %v1410 = vadd.f32 %v1409, %v1395
    %v1411 = vadd.f32 %v1410, %v1396
    %v1412 = vsel %vm964, %v1397, 0.0
    %v1413 = vadd.f32 %v1411, %v1412
    %1414 = vadd.xlane.f32.xlu0 %v1413
    %v1415 = vpop.xlane.xlu0 %1414
    %v1416 = vsel %vm300, %v1398, 0.0
    %v1417 = vsel %vm300, %v1399, 0.0
    %v1418 = vadd.f32 %v1416, %v1417
    %v1419 = vsel %vm300, %v1400, 0.0
    %v1420 = vadd.f32 %v1418, %v1419
    %v1421 = vsel %vm300, %v1401, 0.0
    %v1422 = vadd.f32 %v1420, %v1421
    %v1423 = vsel %vm300, %v1402, 0.0
    %v1424 = vadd.f32 %v1422, %v1423
    %v1425 = vsel %vm300, %v1403, 0.0
    %v1426 = vadd.f32 %v1424, %v1425
    %v1427 = vsel %vm300, %v1404, 0.0
    %v1428 = vadd.f32 %v1426, %v1427
    %v1429 = vsel %vm982, %v1405, 0.0
    %v1430 = vadd.f32 %v1428, %v1429
    %1431 = vadd.xlane.f32.xlu0 %v1430
    %v1432 = vpop.xlane.xlu0 %1431
    %v1433 = vsel %vm300, %v1432, 0.0
    %v1434 = vadd.f32 %v1415, %v1433
    %v1435 = vrot.slane %v1434, 4
    %v1436 = vadd.f32 %v1434, %v1435
    %v1437 = vrot.slane %v1436, 2
    %v1438 = vadd.f32 %v1436, %v1437
    %v1439 = vrot.slane %v1438, 1
    %v1440 = vadd.f32 %v1438, %v1439
    %v1441 = vsel %vm1389, %v1440, 0.0
    %v1442 = vadd.f32 %v1318, %v1441
    %v1443 = vmul.f32 %v1231, %v1373
    %v1444 = vmul.f32 %v1232, %v1374
    %v1445 = vmul.f32 %v1233, %v1375
    %v1446 = vmul.f32 %v1234, %v1376
    %v1447 = vmul.f32 %v1235, %v1377
    %v1448 = vmul.f32 %v1236, %v1378
    %v1449 = vmul.f32 %v1237, %v1379
    %v1450 = vmul.f32 %v1238, %v1380
    %v1451 = vmul.f32 %v1239, %v1381
    %v1452 = vmul.f32 %v1240, %v1382
    %v1453 = vmul.f32 %v1241, %v1383
    %v1454 = vmul.f32 %v1242, %v1384
    %v1455 = vmul.f32 %v1243, %v1385
    %v1456 = vmul.f32 %v1244, %v1386
    %v1457 = vmul.f32 %v1245, %v1387
    %v1458 = vmul.f32 %v1246, %v1388
    %v1459 = vadd.f32 %v1443, %v1444
    %v1460 = vadd.f32 %v1459, %v1445
    %v1461 = vadd.f32 %v1460, %v1446
    %v1462 = vadd.f32 %v1461, %v1447
    %v1463 = vadd.f32 %v1462, %v1448
    %v1464 = vadd.f32 %v1463, %v1449
    %v1465 = vsel %vm964, %v1450, 0.0
    %v1466 = vadd.f32 %v1464, %v1465
    %1467 = vadd.xlane.f32.xlu0 %v1466
    %v1468 = vpop.xlane.xlu0 %1467
    %v1469 = vsel %vm300, %v1451, 0.0
    %v1470 = vsel %vm300, %v1452, 0.0
    %v1471 = vadd.f32 %v1469, %v1470
    %v1472 = vsel %vm300, %v1453, 0.0
    %v1473 = vadd.f32 %v1471, %v1472
    %v1474 = vsel %vm300, %v1454, 0.0
    %v1475 = vadd.f32 %v1473, %v1474
    %v1476 = vsel %vm300, %v1455, 0.0
    %v1477 = vadd.f32 %v1475, %v1476
    %v1478 = vsel %vm300, %v1456, 0.0
    %v1479 = vadd.f32 %v1477, %v1478
    %v1480 = vsel %vm300, %v1457, 0.0
    %v1481 = vadd.f32 %v1479, %v1480
    %v1482 = vsel %vm982, %v1458, 0.0
    %v1483 = vadd.f32 %v1481, %v1482
    %1484 = vadd.xlane.f32.xlu0 %v1483
    %v1485 = vpop.xlane.xlu0 %1484
    %v1486 = vsel %vm300, %v1485, 0.0
    %v1487 = vadd.f32 %v1468, %v1486
    %v1488 = vrot.slane %v1487, 4
    %v1489 = vadd.f32 %v1487, %v1488
    %v1490 = vrot.slane %v1489, 2
    %v1491 = vadd.f32 %v1489, %v1490
    %v1492 = vrot.slane %v1491, 1
    %v1493 = vadd.f32 %v1491, %v1492
    %v1494 = vsel %vm1389, %v1493, 0.0
    %v1495 = vadd.f32 %v1371, %v1494
    %s1496 = scalar_lea.vmem %s3, 256
    %v1497 = vld [vmem:[%s1496] sm:$0xff]
    %v1498 = vld [vmem:[%s1496 + $0x8] sm:$0xff]
    %v1499 = vld [vmem:[%s1496 + $0x10] sm:$0xff]
    %v1500 = vld [vmem:[%s1496 + $0x18] sm:$0xff]
    %v1501 = vld [vmem:[%s1496 + $0x20] sm:$0xff]
    %v1502 = vld [vmem:[%s1496 + $0x28] sm:$0xff]
    %v1503 = vld [vmem:[%s1496 + $0x30] sm:$0xff]
    %v1504 = vld [vmem:[%s1496 + $0x38] sm:$0xff]
    %v1505 = vld [vmem:[%s1496 + $0x40] sm:$0x3]
    %v1506 = vld [vmem:[%s1496 + $0x48] sm:$0x3]
    %v1507 = vld [vmem:[%s1496 + $0x50] sm:$0x3]
    %v1508 = vld [vmem:[%s1496 + $0x58] sm:$0x3]
    %v1509 = vld [vmem:[%s1496 + $0x60] sm:$0x3]
    %v1510 = vld [vmem:[%s1496 + $0x68] sm:$0x3]
    %v1511 = vld [vmem:[%s1496 + $0x70] sm:$0x3]
    %v1512 = vld [vmem:[%s1496 + $0x78] sm:$0x3]
    %vm1513 = vcmp.eq.s32.totalorder %v1248, 2
    %v1514 = vmul.f32 %v1183, %v1497
    %v1515 = vmul.f32 %v1184, %v1498
    %v1516 = vmul.f32 %v1185, %v1499
    %v1517 = vmul.f32 %v1186, %v1500
    %v1518 = vmul.f32 %v1187, %v1501
    %v1519 = vmul.f32 %v1188, %v1502
    %v1520 = vmul.f32 %v1189, %v1503
    %v1521 = vmul.f32 %v1190, %v1504
    %v1522 = vmul.f32 %v1191, %v1505
    %v1523 = vmul.f32 %v1192, %v1506
    %v1524 = vmul.f32 %v1193, %v1507
    %v1525 = vmul.f32 %v1194, %v1508
    %v1526 = vmul.f32 %v1195, %v1509
    %v1527 = vmul.f32 %v1196, %v1510
    %v1528 = vmul.f32 %v1197, %v1511
    %v1529 = vmul.f32 %v1198, %v1512
    %v1530 = vadd.f32 %v1514, %v1515
    %v1531 = vadd.f32 %v1530, %v1516
    %v1532 = vadd.f32 %v1531, %v1517
    %v1533 = vadd.f32 %v1532, %v1518
    %v1534 = vadd.f32 %v1533, %v1519
    %v1535 = vadd.f32 %v1534, %v1520
    %v1536 = vsel %vm964, %v1521, 0.0
    %v1537 = vadd.f32 %v1535, %v1536
    %1538 = vadd.xlane.f32.xlu0 %v1537
    %v1539 = vpop.xlane.xlu0 %1538
    %v1540 = vsel %vm300, %v1522, 0.0
    %v1541 = vsel %vm300, %v1523, 0.0
    %v1542 = vadd.f32 %v1540, %v1541
    %v1543 = vsel %vm300, %v1524, 0.0
    %v1544 = vadd.f32 %v1542, %v1543
    %v1545 = vsel %vm300, %v1525, 0.0
    %v1546 = vadd.f32 %v1544, %v1545
    %v1547 = vsel %vm300, %v1526, 0.0
    %v1548 = vadd.f32 %v1546, %v1547
    %v1549 = vsel %vm300, %v1527, 0.0
    %v1550 = vadd.f32 %v1548, %v1549
    %v1551 = vsel %vm300, %v1528, 0.0
    %v1552 = vadd.f32 %v1550, %v1551
    %v1553 = vsel %vm982, %v1529, 0.0
    %v1554 = vadd.f32 %v1552, %v1553
    %1555 = vadd.xlane.f32.xlu0 %v1554
    %v1556 = vpop.xlane.xlu0 %1555
    %v1557 = vsel %vm300, %v1556, 0.0
    %v1558 = vadd.f32 %v1539, %v1557
    %v1559 = vrot.slane %v1558, 4
    %v1560 = vadd.f32 %v1558, %v1559
    %v1561 = vrot.slane %v1560, 2
    %v1562 = vadd.f32 %v1560, %v1561
    %v1563 = vrot.slane %v1562, 1
    %v1564 = vadd.f32 %v1562, %v1563
    %v1565 = vsel %vm1513, %v1564, 0.0
    %v1566 = vadd.f32 %v1442, %v1565
    %v1567 = vmul.f32 %v1231, %v1497
    %v1568 = vmul.f32 %v1232, %v1498
    %v1569 = vmul.f32 %v1233, %v1499
    %v1570 = vmul.f32 %v1234, %v1500
    %v1571 = vmul.f32 %v1235, %v1501
    %v1572 = vmul.f32 %v1236, %v1502
    %v1573 = vmul.f32 %v1237, %v1503
    %v1574 = vmul.f32 %v1238, %v1504
    %v1575 = vmul.f32 %v1239, %v1505
    %v1576 = vmul.f32 %v1240, %v1506
    %v1577 = vmul.f32 %v1241, %v1507
    %v1578 = vmul.f32 %v1242, %v1508
    %v1579 = vmul.f32 %v1243, %v1509
    %v1580 = vmul.f32 %v1244, %v1510
    %v1581 = vmul.f32 %v1245, %v1511
    %v1582 = vmul.f32 %v1246, %v1512
    %v1583 = vadd.f32 %v1567, %v1568
    %v1584 = vadd.f32 %v1583, %v1569
    %v1585 = vadd.f32 %v1584, %v1570
    %v1586 = vadd.f32 %v1585, %v1571
    %v1587 = vadd.f32 %v1586, %v1572
    %v1588 = vadd.f32 %v1587, %v1573
    %v1589 = vsel %vm964, %v1574, 0.0
    %v1590 = vadd.f32 %v1588, %v1589
    %1591 = vadd.xlane.f32.xlu0 %v1590
    %v1592 = vpop.xlane.xlu0 %1591
    %v1593 = vsel %vm300, %v1575, 0.0
    %v1594 = vsel %vm300, %v1576, 0.0
    %v1595 = vadd.f32 %v1593, %v1594
    %v1596 = vsel %vm300, %v1577, 0.0
    %v1597 = vadd.f32 %v1595, %v1596
    %v1598 = vsel %vm300, %v1578, 0.0
    %v1599 = vadd.f32 %v1597, %v1598
    %v1600 = vsel %vm300, %v1579, 0.0
    %v1601 = vadd.f32 %v1599, %v1600
    %v1602 = vsel %vm300, %v1580, 0.0
    %v1603 = vadd.f32 %v1601, %v1602
    %v1604 = vsel %vm300, %v1581, 0.0
    %v1605 = vadd.f32 %v1603, %v1604
    %v1606 = vsel %vm982, %v1582, 0.0
    %v1607 = vadd.f32 %v1605, %v1606
    %1608 = vadd.xlane.f32.xlu0 %v1607
    %v1609 = vpop.xlane.xlu0 %1608
    %v1610 = vsel %vm300, %v1609, 0.0
    %v1611 = vadd.f32 %v1592, %v1610
    %v1612 = vrot.slane %v1611, 4
    %v1613 = vadd.f32 %v1611, %v1612
    %v1614 = vrot.slane %v1613, 2
    %v1615 = vadd.f32 %v1613, %v1614
    %v1616 = vrot.slane %v1615, 1
    %v1617 = vadd.f32 %v1615, %v1616
    %v1618 = vsel %vm1513, %v1617, 0.0
    %v1619 = vadd.f32 %v1495, %v1618
    %s1620 = scalar_lea.vmem %s3, 384
    %v1621 = vld [vmem:[%s1620] sm:$0xff]
    %v1622 = vld [vmem:[%s1620 + $0x8] sm:$0xff]
    %v1623 = vld [vmem:[%s1620 + $0x10] sm:$0xff]
    %v1624 = vld [vmem:[%s1620 + $0x18] sm:$0xff]
    %v1625 = vld [vmem:[%s1620 + $0x20] sm:$0xff]
    %v1626 = vld [vmem:[%s1620 + $0x28] sm:$0xff]
    %v1627 = vld [vmem:[%s1620 + $0x30] sm:$0xff]
    %v1628 = vld [vmem:[%s1620 + $0x38] sm:$0xff]
    %v1629 = vld [vmem:[%s1620 + $0x40] sm:$0x3]
    %v1630 = vld [vmem:[%s1620 + $0x48] sm:$0x3]
    %v1631 = vld [vmem:[%s1620 + $0x50] sm:$0x3]
    %v1632 = vld [vmem:[%s1620 + $0x58] sm:$0x3]
    %v1633 = vld [vmem:[%s1620 + $0x60] sm:$0x3]
    %v1634 = vld [vmem:[%s1620 + $0x68] sm:$0x3]
    %v1635 = vld [vmem:[%s1620 + $0x70] sm:$0x3]
    %v1636 = vld [vmem:[%s1620 + $0x78] sm:$0x3]
    %vm1637 = vcmp.eq.s32.totalorder %v1248, 3
    %v1638 = vmul.f32 %v1183, %v1621
    %v1639 = vmul.f32 %v1184, %v1622
    %v1640 = vmul.f32 %v1185, %v1623
    %v1641 = vmul.f32 %v1186, %v1624
    %v1642 = vmul.f32 %v1187, %v1625
    %v1643 = vmul.f32 %v1188, %v1626
    %v1644 = vmul.f32 %v1189, %v1627
    %v1645 = vmul.f32 %v1190, %v1628
    %v1646 = vmul.f32 %v1191, %v1629
    %v1647 = vmul.f32 %v1192, %v1630
    %v1648 = vmul.f32 %v1193, %v1631
    %v1649 = vmul.f32 %v1194, %v1632
    %v1650 = vmul.f32 %v1195, %v1633
    %v1651 = vmul.f32 %v1196, %v1634
    %v1652 = vmul.f32 %v1197, %v1635
    %v1653 = vmul.f32 %v1198, %v1636
    %v1654 = vadd.f32 %v1638, %v1639
    %v1655 = vadd.f32 %v1654, %v1640
    %v1656 = vadd.f32 %v1655, %v1641
    %v1657 = vadd.f32 %v1656, %v1642
    %v1658 = vadd.f32 %v1657, %v1643
    %v1659 = vadd.f32 %v1658, %v1644
    %v1660 = vsel %vm964, %v1645, 0.0
    %v1661 = vadd.f32 %v1659, %v1660
    %1662 = vadd.xlane.f32.xlu0 %v1661
    %v1663 = vpop.xlane.xlu0 %1662
    %v1664 = vsel %vm300, %v1646, 0.0
    %v1665 = vsel %vm300, %v1647, 0.0
    %v1666 = vadd.f32 %v1664, %v1665
    %v1667 = vsel %vm300, %v1648, 0.0
    %v1668 = vadd.f32 %v1666, %v1667
    %v1669 = vsel %vm300, %v1649, 0.0
    %v1670 = vadd.f32 %v1668, %v1669
    %v1671 = vsel %vm300, %v1650, 0.0
    %v1672 = vadd.f32 %v1670, %v1671
    %v1673 = vsel %vm300, %v1651, 0.0
    %v1674 = vadd.f32 %v1672, %v1673
    %v1675 = vsel %vm300, %v1652, 0.0
    %v1676 = vadd.f32 %v1674, %v1675
    %v1677 = vsel %vm982, %v1653, 0.0
    %v1678 = vadd.f32 %v1676, %v1677
    %1679 = vadd.xlane.f32.xlu0 %v1678
    %v1680 = vpop.xlane.xlu0 %1679
    %v1681 = vsel %vm300, %v1680, 0.0
    %v1682 = vadd.f32 %v1663, %v1681
    %v1683 = vrot.slane %v1682, 4
    %v1684 = vadd.f32 %v1682, %v1683
    %v1685 = vrot.slane %v1684, 2
    %v1686 = vadd.f32 %v1684, %v1685
    %v1687 = vrot.slane %v1686, 1
    %v1688 = vadd.f32 %v1686, %v1687
    %v1689 = vsel %vm1637, %v1688, 0.0
    %v1690 = vadd.f32 %v1566, %v1689
    %v1691 = vmul.f32 %v1231, %v1621
    %v1692 = vmul.f32 %v1232, %v1622
    %v1693 = vmul.f32 %v1233, %v1623
    %v1694 = vmul.f32 %v1234, %v1624
    %v1695 = vmul.f32 %v1235, %v1625
    %v1696 = vmul.f32 %v1236, %v1626
    %v1697 = vmul.f32 %v1237, %v1627
    %v1698 = vmul.f32 %v1238, %v1628
    %v1699 = vmul.f32 %v1239, %v1629
    %v1700 = vmul.f32 %v1240, %v1630
    %v1701 = vmul.f32 %v1241, %v1631
    %v1702 = vmul.f32 %v1242, %v1632
    %v1703 = vmul.f32 %v1243, %v1633
    %v1704 = vmul.f32 %v1244, %v1634
    %v1705 = vmul.f32 %v1245, %v1635
    %v1706 = vmul.f32 %v1246, %v1636
    %v1707 = vadd.f32 %v1691, %v1692
    %v1708 = vadd.f32 %v1707, %v1693
    %v1709 = vadd.f32 %v1708, %v1694
    %v1710 = vadd.f32 %v1709, %v1695
    %v1711 = vadd.f32 %v1710, %v1696
    %v1712 = vadd.f32 %v1711, %v1697
    %v1713 = vsel %vm964, %v1698, 0.0
    %v1714 = vadd.f32 %v1712, %v1713
    %1715 = vadd.xlane.f32.xlu0 %v1714
    %v1716 = vpop.xlane.xlu0 %1715
    %v1717 = vsel %vm300, %v1699, 0.0
    %v1718 = vsel %vm300, %v1700, 0.0
    %v1719 = vadd.f32 %v1717, %v1718
    %v1720 = vsel %vm300, %v1701, 0.0
    %v1721 = vadd.f32 %v1719, %v1720
    %v1722 = vsel %vm300, %v1702, 0.0
    %v1723 = vadd.f32 %v1721, %v1722
    %v1724 = vsel %vm300, %v1703, 0.0
    %v1725 = vadd.f32 %v1723, %v1724
    %v1726 = vsel %vm300, %v1704, 0.0
    %v1727 = vadd.f32 %v1725, %v1726
    %v1728 = vsel %vm300, %v1705, 0.0
    %v1729 = vadd.f32 %v1727, %v1728
    %v1730 = vsel %vm982, %v1706, 0.0
    %v1731 = vadd.f32 %v1729, %v1730
    %1732 = vadd.xlane.f32.xlu0 %v1731
    %v1733 = vpop.xlane.xlu0 %1732
    %v1734 = vsel %vm300, %v1733, 0.0
    %v1735 = vadd.f32 %v1716, %v1734
    %v1736 = vrot.slane %v1735, 4
    %v1737 = vadd.f32 %v1735, %v1736
    %v1738 = vrot.slane %v1737, 2
    %v1739 = vadd.f32 %v1737, %v1738
    %v1740 = vrot.slane %v1739, 1
    %v1741 = vadd.f32 %v1739, %v1740
    %v1742 = vsel %vm1637, %v1741, 0.0
    %v1743 = vadd.f32 %v1619, %v1742
    %s1744 = scalar_lea.vmem %s3, 512
    %v1745 = vld [vmem:[%s1744] sm:$0xff]
    %v1746 = vld [vmem:[%s1744 + $0x8] sm:$0xff]
    %v1747 = vld [vmem:[%s1744 + $0x10] sm:$0xff]
    %v1748 = vld [vmem:[%s1744 + $0x18] sm:$0xff]
    %v1749 = vld [vmem:[%s1744 + $0x20] sm:$0xff]
    %v1750 = vld [vmem:[%s1744 + $0x28] sm:$0xff]
    %v1751 = vld [vmem:[%s1744 + $0x30] sm:$0xff]
    %v1752 = vld [vmem:[%s1744 + $0x38] sm:$0xff]
    %v1753 = vld [vmem:[%s1744 + $0x40] sm:$0x3]
    %v1754 = vld [vmem:[%s1744 + $0x48] sm:$0x3]
    %v1755 = vld [vmem:[%s1744 + $0x50] sm:$0x3]
    %v1756 = vld [vmem:[%s1744 + $0x58] sm:$0x3]
    %v1757 = vld [vmem:[%s1744 + $0x60] sm:$0x3]
    %v1758 = vld [vmem:[%s1744 + $0x68] sm:$0x3]
    %v1759 = vld [vmem:[%s1744 + $0x70] sm:$0x3]
    %v1760 = vld [vmem:[%s1744 + $0x78] sm:$0x3]
    %vm1761 = vcmp.eq.s32.totalorder %v1248, 4
    %v1762 = vmul.f32 %v1183, %v1745
    %v1763 = vmul.f32 %v1184, %v1746
    %v1764 = vmul.f32 %v1185, %v1747
    %v1765 = vmul.f32 %v1186, %v1748
    %v1766 = vmul.f32 %v1187, %v1749
    %v1767 = vmul.f32 %v1188, %v1750
    %v1768 = vmul.f32 %v1189, %v1751
    %v1769 = vmul.f32 %v1190, %v1752
    %v1770 = vmul.f32 %v1191, %v1753
    %v1771 = vmul.f32 %v1192, %v1754
    %v1772 = vmul.f32 %v1193, %v1755
    %v1773 = vmul.f32 %v1194, %v1756
    %v1774 = vmul.f32 %v1195, %v1757
    %v1775 = vmul.f32 %v1196, %v1758
    %v1776 = vmul.f32 %v1197, %v1759
    %v1777 = vmul.f32 %v1198, %v1760
    %v1778 = vadd.f32 %v1762, %v1763
    %v1779 = vadd.f32 %v1778, %v1764
    %v1780 = vadd.f32 %v1779, %v1765
    %v1781 = vadd.f32 %v1780, %v1766
    %v1782 = vadd.f32 %v1781, %v1767
    %v1783 = vadd.f32 %v1782, %v1768
    %v1784 = vsel %vm964, %v1769, 0.0
    %v1785 = vadd.f32 %v1783, %v1784
    %1786 = vadd.xlane.f32.xlu0 %v1785
    %v1787 = vpop.xlane.xlu0 %1786
    %v1788 = vsel %vm300, %v1770, 0.0
    %v1789 = vsel %vm300, %v1771, 0.0
    %v1790 = vadd.f32 %v1788, %v1789
    %v1791 = vsel %vm300, %v1772, 0.0
    %v1792 = vadd.f32 %v1790, %v1791
    %v1793 = vsel %vm300, %v1773, 0.0
    %v1794 = vadd.f32 %v1792, %v1793
    %v1795 = vsel %vm300, %v1774, 0.0
    %v1796 = vadd.f32 %v1794, %v1795
    %v1797 = vsel %vm300, %v1775, 0.0
    %v1798 = vadd.f32 %v1796, %v1797
    %v1799 = vsel %vm300, %v1776, 0.0
    %v1800 = vadd.f32 %v1798, %v1799
    %v1801 = vsel %vm982, %v1777, 0.0
    %v1802 = vadd.f32 %v1800, %v1801
    %1803 = vadd.xlane.f32.xlu0 %v1802
    %v1804 = vpop.xlane.xlu0 %1803
    %v1805 = vsel %vm300, %v1804, 0.0
    %v1806 = vadd.f32 %v1787, %v1805
    %v1807 = vrot.slane %v1806, 4
    %v1808 = vadd.f32 %v1806, %v1807
    %v1809 = vrot.slane %v1808, 2
    %v1810 = vadd.f32 %v1808, %v1809
    %v1811 = vrot.slane %v1810, 1
    %v1812 = vadd.f32 %v1810, %v1811
    %v1813 = vsel %vm1761, %v1812, 0.0
    %v1814 = vadd.f32 %v1690, %v1813
    %v1815 = vmul.f32 %v1231, %v1745
    %v1816 = vmul.f32 %v1232, %v1746
    %v1817 = vmul.f32 %v1233, %v1747
    %v1818 = vmul.f32 %v1234, %v1748
    %v1819 = vmul.f32 %v1235, %v1749
    %v1820 = vmul.f32 %v1236, %v1750
    %v1821 = vmul.f32 %v1237, %v1751
    %v1822 = vmul.f32 %v1238, %v1752
    %v1823 = vmul.f32 %v1239, %v1753
    %v1824 = vmul.f32 %v1240, %v1754
    %v1825 = vmul.f32 %v1241, %v1755
    %v1826 = vmul.f32 %v1242, %v1756
    %v1827 = vmul.f32 %v1243, %v1757
    %v1828 = vmul.f32 %v1244, %v1758
    %v1829 = vmul.f32 %v1245, %v1759
    %v1830 = vmul.f32 %v1246, %v1760
    %v1831 = vadd.f32 %v1815, %v1816
    %v1832 = vadd.f32 %v1831, %v1817
    %v1833 = vadd.f32 %v1832, %v1818
    %v1834 = vadd.f32 %v1833, %v1819
    %v1835 = vadd.f32 %v1834, %v1820
    %v1836 = vadd.f32 %v1835, %v1821
    %v1837 = vsel %vm964, %v1822, 0.0
    %v1838 = vadd.f32 %v1836, %v1837
    %1839 = vadd.xlane.f32.xlu0 %v1838
    %v1840 = vpop.xlane.xlu0 %1839
    %v1841 = vsel %vm300, %v1823, 0.0
    %v1842 = vsel %vm300, %v1824, 0.0
    %v1843 = vadd.f32 %v1841, %v1842
    %v1844 = vsel %vm300, %v1825, 0.0
    %v1845 = vadd.f32 %v1843, %v1844
    %v1846 = vsel %vm300, %v1826, 0.0
    %v1847 = vadd.f32 %v1845, %v1846
    %v1848 = vsel %vm300, %v1827, 0.0
    %v1849 = vadd.f32 %v1847, %v1848
    %v1850 = vsel %vm300, %v1828, 0.0
    %v1851 = vadd.f32 %v1849, %v1850
    %v1852 = vsel %vm300, %v1829, 0.0
    %v1853 = vadd.f32 %v1851, %v1852
    %v1854 = vsel %vm982, %v1830, 0.0
    %v1855 = vadd.f32 %v1853, %v1854
    %1856 = vadd.xlane.f32.xlu0 %v1855
    %v1857 = vpop.xlane.xlu0 %1856
    %v1858 = vsel %vm300, %v1857, 0.0
    %v1859 = vadd.f32 %v1840, %v1858
    %v1860 = vrot.slane %v1859, 4
    %v1861 = vadd.f32 %v1859, %v1860
    %v1862 = vrot.slane %v1861, 2
    %v1863 = vadd.f32 %v1861, %v1862
    %v1864 = vrot.slane %v1863, 1
    %v1865 = vadd.f32 %v1863, %v1864
    %v1866 = vsel %vm1761, %v1865, 0.0
    %v1867 = vadd.f32 %v1743, %v1866
    %v1868 = vadd.f32 %v1814, %v1867
    %v1869 = vmul.f32 %v1868, 0.5
    %v1870 = vsub.f32 %v1814, %v1869
    %v1871 = vsub.f32 %v1867, %v1869
    %v1872 = vmul.f32 %v1870, %v1870
    %v1873 = vmul.f32 %v1871, %v1871
    %v1874 = vadd.f32 %v1872, %v1873
    %v1875 = vmul.f32 %v1874, 0.5
    %v1876 = vadd.f32 %v1875, 1e-05
    %v1877 = vrsqrt.pop %v1876
    %v1878 = vld [vmem:[%s4] sm:$0x1]
    %v1879 = vmul.f32 %v1877, %v1878
    %v1880 = vmul.f32 %v1870, %v1879
    %s1881 = scalar_lea.vmem %s4, 1
    %v1882 = vld [vmem:[%s1881] sm:$0x1]
    %v1883 = vadd.f32 %v1880, %v1882
    %v1884 = vmax.f32 %v1883, 0.0
    %v1885 = vmul.f32 %v1871, %v1879
    %v1886 = vadd.f32 %v1885, %v1882
    %v1887 = vmax.f32 %v1886, 0.0
    %v1888 = vld [vmem:[%s5] sm:$0x1f]
    %s1889 = scalar_lea.vmem %s4, 2
    %v1890 = vld [vmem:[%s1889] sm:$0x1]
    %vm1891 = vcmask 39936
    %v1893 = vsel %vm1891, %v1884, 0
    %vm1895 = vcmask 1044480
    %v1897 = vsel %vm1895, %v1888, 0
    %1899 = vmatprep.subr.mxu0 0.0
    %1900 = vmatpush1.msra.mxu0 %v1897
    %1901 = vmatprep.subr.mxu0 0.0
    %1902 = vmatpush1.msra.mxu0 0.0
    %1903 = vmatprep.subr.mxu0 0.0
    %1904 = vmatpush1.msra.mxu0 0.0
    %1905 = vmatprep.subr.mxu0 0.0
    %1906 = vmatpush1.msra.mxu0 0.0
    %1907 = vmatprep.subr.mxu0 0.0
    %1908 = vmatpush1.msra.mxu0 0.0
    %1909 = vmatprep.subr.mxu0 0.0
    %1910 = vmatpush1.msra.mxu0 0.0
    %1911 = vmatprep.subr.mxu0 0.0
    %1912 = vmatpush1.msra.mxu0 0.0
    %1913 = vmatprep.subr.mxu0 0.0
    %1914 = vmatpush1.msra.mxu0 0.0
    %1915 = vmatprep.subr.mxu0 0.0
    %1916 = vmatpush1.msra.mxu0 0.0
    %1917 = vmatprep.subr.mxu0 0.0
    %1918 = vmatpush1.msra.mxu0 0.0
    %1919 = vmatprep.subr.mxu0 0.0
    %1920 = vmatpush1.msra.mxu0 0.0
    %1921 = vmatprep.subr.mxu0 0.0
    %1922 = vmatpush1.msra.mxu0 0.0
    %1923 = vmatprep.subr.mxu0 0.0
    %1924 = vmatpush1.msra.mxu0 0.0
    %1925 = vmatprep.subr.mxu0 0.0
    %1926 = vmatpush1.msra.mxu0 0.0
    %1927 = vmatprep.subr.mxu0 0.0
    %1928 = vmatpush1.msra.mxu0 0.0
    %1929 = vmatprep.subr.mxu0 0.0
    %1930 = vmatpush1.msra.mxu0 0.0
    %1931 = vmatprep.subr.mxu0 0.0
    %1932 = vmatpush1.msra.mxu0 0.0
    %1933 = vmatprep.subr.mxu0 0.0
    %1934 = vmatpush1.msra.mxu0 0.0
    %1935 = vmatprep.subr.mxu0 0.0
    %1936 = vmatpush1.msra.mxu0 0.0
    %1937 = vmatprep.subr.mxu0 0.0
    %1938 = vmatpush1.msra.mxu0 0.0
    %1939 = vmatprep.subr.mxu0 0.0
    %1940 = vmatpush1.msra.mxu0 0.0
    %1941 = vmatprep.subr.mxu0 0.0
    %1942 = vmatpush1.msra.mxu0 0.0
    %1943 = vmatprep.subr.mxu0 0.0
    %1944 = vmatpush1.msra.mxu0 0.0
    %1945 = vmatprep.subr.mxu0 0.0
    %1946 = vmatpush1.msra.mxu0 0.0
    %1947 = vmatprep.subr.mxu0 0.0
    %1948 = vmatpush1.msra.mxu0 0.0
    %1949 = vmatprep.subr.mxu0 0.0
    %1950 = vmatpush1.msra.mxu0 0.0
    %1951 = vmatprep.subr.mxu0 0.0
    %1952 = vmatpush1.msra.mxu0 0.0
    %1953 = vmatprep.subr.mxu0 0.0
    %1954 = vmatpush1.msra.mxu0 0.0
    %1955 = vmatprep.subr.mxu0 0.0
    %1956 = vmatpush1.msra.mxu0 0.0
    %1957 = vmatprep.subr.mxu0 0.0
    %1958 = vmatpush1.msra.mxu0 0.0
    %1959 = vmatprep.subr.mxu0 0.0
    %1960 = vmatpush1.msra.mxu0 0.0
    %1961 = vmatprep.subr.mxu0 0.0
    %1962 = vmatpush1.msra.mxu0 0.0
    %1963 = vmatprep.mubr.f32.mxu0 0.0
    %1964 = vmatmul.mubr.f32.gmra.mrb[0].mxu0 %v1893
    %v1965 = vpop.f32.mrb[0].mxu0
    %v1966 = vadd.f32 %v1890, %v1965
    %v1967 = vpop.f32.mrb[0].mxu0
    %1968 = vdwg.mxu0
    %vm1969 = vcmask 8192
    %1970 = vst.msk [vmem:[#allocation2] sm:$0x1] %vm1969, %v1966
    %v1972 = vsel %vm1891, %v1887, 0
    %1974 = vmatprep.subr.mxu0 0.0
    %1975 = vmatpush1.msra.mxu0 %v1897
    %1976 = vmatprep.subr.mxu0 0.0
    %1977 = vmatpush1.msra.mxu0 0.0
    %1978 = vmatprep.subr.mxu0 0.0
    %1979 = vmatpush1.msra.mxu0 0.0
    %1980 = vmatprep.subr.mxu0 0.0
    %1981 = vmatpush1.msra.mxu0 0.0
    %1982 = vmatprep.subr.mxu0 0.0
    %1983 = vmatpush1.msra.mxu0 0.0
    %1984 = vmatprep.subr.mxu0 0.0
    %1985 = vmatpush1.msra.mxu0 0.0
    %1986 = vmatprep.subr.mxu0 0.0
    %1987 = vmatpush1.msra.mxu0 0.0
    %1988 = vmatprep.subr.mxu0 0.0
    %1989 = vmatpush1.msra.mxu0 0.0
    %1990 = vmatprep.subr.mxu0 0.0
    %1991 = vmatpush1.msra.mxu0 0.0
    %1992 = vmatprep.subr.mxu0 0.0
    %1993 = vmatpush1.msra.mxu0 0.0
    %1994 = vmatprep.subr.mxu0 0.0
    %1995 = vmatpush1.msra.mxu0 0.0
    %1996 = vmatprep.subr.mxu0 0.0
    %1997 = vmatpush1.msra.mxu0 0.0
    %1998 = vmatprep.subr.mxu0 0.0
    %1999 = vmatpush1.msra.mxu0 0.0
    %2000 = vmatprep.subr.mxu0 0.0
    %2001 = vmatpush1.msra.mxu0 0.0
    %2002 = vmatprep.subr.mxu0 0.0
    %2003 = vmatpush1.msra.mxu0 0.0
    %2004 = vmatprep.subr.mxu0 0.0
    %2005 = vmatpush1.msra.mxu0 0.0
    %2006 = vmatprep.subr.mxu0 0.0
    %2007 = vmatpush1.msra.mxu0 0.0
    %2008 = vmatprep.subr.mxu0 0.0
    %2009 = vmatpush1.msra.mxu0 0.0
    %2010 = vmatprep.subr.mxu0 0.0
    %2011 = vmatpush1.msra.mxu0 0.0
    %2012 = vmatprep.subr.mxu0 0.0
    %2013 = vmatpush1.msra.mxu0 0.0
    %2014 = vmatprep.subr.mxu0 0.0
    %2015 = vmatpush1.msra.mxu0 0.0
    %2016 = vmatprep.subr.mxu0 0.0
    %2017 = vmatpush1.msra.mxu0 0.0
    %2018 = vmatprep.subr.mxu0 0.0
    %2019 = vmatpush1.msra.mxu0 0.0
    %2020 = vmatprep.subr.mxu0 0.0
    %2021 = vmatpush1.msra.mxu0 0.0
    %2022 = vmatprep.subr.mxu0 0.0
    %2023 = vmatpush1.msra.mxu0 0.0
    %2024 = vmatprep.subr.mxu0 0.0
    %2025 = vmatpush1.msra.mxu0 0.0
    %2026 = vmatprep.subr.mxu0 0.0
    %2027 = vmatpush1.msra.mxu0 0.0
    %2028 = vmatprep.subr.mxu0 0.0
    %2029 = vmatpush1.msra.mxu0 0.0
    %2030 = vmatprep.subr.mxu0 0.0
    %2031 = vmatpush1.msra.mxu0 0.0
    %2032 = vmatprep.subr.mxu0 0.0
    %2033 = vmatpush1.msra.mxu0 0.0
    %2034 = vmatprep.subr.mxu0 0.0
    %2035 = vmatpush1.msra.mxu0 0.0
    %2036 = vmatprep.subr.mxu0 0.0
    %2037 = vmatpush1.msra.mxu0 0.0
    %2038 = vmatprep.mubr.f32.mxu0 0.0
    %2039 = vmatmul.mubr.f32.gmra.mrb[0].mxu0 %v1972
    %v2040 = vpop.f32.mrb[0].mxu0
    %v2041 = vadd.f32 %v1890, %v2040
    %v2042 = vpop.f32.mrb[0].mxu0
    %2043 = vdwg.mxu0
    %2044 = vst.msk [vmem:[#allocation2 + $0x1] sm:$0x1] %vm1969, %v2041
    // Predicated region
    $region26: #{tpu_custom_call.1} parent=1 // pred_check
      _
    $region27: #{tpu_custom_call.1} parent=1 // pred_check_branch
      %2046 = sbr.rel (0) target = $region29
    $region28: #{tpu_custom_call.1} parent=1 // pred_region
      %s2048 = ssub.s32 32, 32
      %2049 = vsyncadd [#allocation3], %s2048
      %s2051 = sshll.u32 [#allocation2], 4
      %s2052 = int_to_ptr.vmem [resolvable:$true] %s2051
      %2054 = dma.vmem_to_hbm [thread:$0]  %s2052, 32, %s6, [#allocation3]
    $region29: #{tpu_custom_call.1} parent=1 // pred_fallthru
      _
    // Predicated region
    $region30: #{tpu_custom_call.1} parent=1 // pred_check
      _
    $region31: #{tpu_custom_call.1} parent=1 // pred_check_branch
      %2056 = sbr.rel (0) target = $region33
    $region32: #{tpu_custom_call.1} parent=1 // pred_region
      %2057 = dma.done [#allocation3], 32
    $region33: #{tpu_custom_call.1} parent=1 // pred_fallthru
      _
    %2058 = vsyncpa [#allocation3], 1

</llo_original>
